<compile_context>
chip_gen: v7x
topology: tpu7x:2x2x1
jax: 0.10.0
libtpu: 0.0.40
codegen_flags: <defaults>
</compile_context>

<pallas_src>
import functools
import math

import jax
import jax.numpy as jnp
from jax import lax
from jax.experimental import pallas as pl
from jax.experimental.pallas import tpu as pltpu


def _decoder_kernel(text_ref, vis_ref, pe_ref, o_ref, *,
                    inv_temp, softmax_axis, precision):
    """text_ref: (K,TB,D)  vis_ref: (N,TB,D)  pe_ref: (N,D)  o_ref: (K,TB,D)."""
    # One relayout per block to batch-major; afterwards every matmul operand is
    # a contiguous, batch-leading tile (no per-batch-element sublane slicing).
    t = jnp.transpose(text_ref[...], (1, 0, 2))                  # (TB, K, D)
    v = jnp.transpose(vis_ref[...], (1, 0, 2))                   # (TB, N, D)
    vpe = (v + pe_ref[...][None, :, :]).astype(t.dtype)          # (TB, N, D)

    # Logits S[b,k,n] = sum_d text[k,b,d] * vis_pe[n,b,d]; 1/temp applied to
    # the f32 logits (not folded into a lower-precision operand).
    s = jnp.einsum("bkd,bnd->bkn", t, vpe,
                   preferred_element_type=jnp.float32,
                   precision=precision) * inv_temp               # (TB, K, N) f32

    # Softmax over dim 2 ('patch') or dim 1 ('n_dense_cls') of (B, K, N) —
    # exact f32 softmax (no approximate reciprocal).
    m = jnp.max(s, axis=softmax_axis, keepdims=True)
    e = jnp.exp(s - m)
    p = e / jnp.sum(e, axis=softmax_axis, keepdims=True)         # (TB, K, N) f32

    # decoded[b,k,d] = sum_n p[b,k,n] * vision[b,n,d]
    dec = jnp.einsum("bkn,bnd->bkd", p.astype(v.dtype), v,
                     preferred_element_type=jnp.float32,
                     precision=precision)                        # (TB, K, D) f32

    # Single whole-block, lane-dense store in the module's (K, B, D) layout.
    o_ref[...] = jnp.transpose(dec, (1, 0, 2)).astype(o_ref.dtype)


def _vmem_capacity_bytes():
    """Physical VMEM per TensorCore; conservative fallback if not on a TPU."""
    try:
        return int(pltpu.get_tpu_info().vmem_capacity_bytes)
    except Exception:
        return 64 * 1024 * 1024


def _block_vmem_bytes(tb, K, N, D, itemsize):
    io = 2 * (2 * K + N) * tb * D * itemsize            # double-buffered text/out + vision
    pe = 2 * N * D * itemsize                           # resident pe block
    interm = tb * (3 * K * N + 2 * (K + N) * D) * 4     # f32 s/e/p + relaid-out copies
    return io + pe + interm


def _choose_tb(B, K, N, D, itemsize, vmem_cap):
    """Batch tile: sublane-aligned (multiple of 8), budget- and megacore-aware."""
    if B <= 8:
        return B                         # block == full batch dim (always legal)
    budget = int(0.45 * vmem_cap)        # headroom for compiler scratch etc.
    upper = max(8, B // 2)               # guarantee >= 2 grid steps for B >= 16
    fitting = [c for c in (128, 64, 32, 16, 8)
               if c <= upper and _block_vmem_bytes(c, K, N, D, itemsize) <= budget]
    if not fitting:
        return 8
    for c in fitting:                    # prefer a tile that divides B (no padding)
        if B % c == 0:
            return c
    return fitting[0]


def shallow_decoder_forward(text, vision, pe, *,
                            pos_alpha=0.5, temp_decoder=0.07,
                            decoder_softmax_dim="patch",
                            batch_tile=None, compute_dtype=None):
    """text: (K,B,D), vision: (N,B,D), pe: (max_len,D) or (1,max_len,D) -> (K,B,D)."""
    K, B, D = text.shape
    N = vision.shape[0]
    assert vision.shape == (N, B, D)
    if pe.ndim == 3:                     # torch buffer shape (1, max_len, D)
        pe = pe[0]

    # mapping_softmax_dim on (B, K, N): 'patch' -> 2, 'n_dense_cls' -> 1
    softmax_axis = {"patch": 2, "n_dense_cls": 1}[decoder_softmax_dim]

    if compute_dtype is not None:        # opt-in bf16 (HBM-bound kernel)
        text = text.astype(compute_dtype)
        vision = vision.astype(compute_dtype)
    in_dtype = text.dtype
    itemsize = jnp.dtype(in_dtype).itemsize

    # Full f32 matmul precision when inputs are f32 (torch does full f32; the
    # 1/temp ~ 14x gain would otherwise amplify low-precision logit error).
    precision = lax.Precision.HIGHEST if in_dtype == jnp.float32 else None

    # Hoist the batch-invariant positional-encoding scale out of the kernel.
    pe_scaled = (jnp.asarray(pe[:N], jnp.float32) *
                 jnp.float32(pos_alpha)).astype(in_dtype)         # (N, D)

    vmem_cap = _vmem_capacity_bytes()
    tb = int(batch_tile) if batch_tile is not None else _choose_tb(
        B, K, N, D, itemsize, vmem_cap)

    # Pad the batch (sublane axis of the blocks) so the tile divides it; the
    # padded rows are sliced off below (zero logits -> finite softmax, no NaNs).
    Bp = B
    if tb != B:
        assert tb % 8 == 0, "batch tile must be a multiple of 8 (or the full batch)"
        Bp = ((B + tb - 1) // tb) * tb
        if Bp != B:
            padw = Bp - B
            text = jnp.pad(text, ((0, 0), (0, padw), (0, 0)))
            vision = jnp.pad(vision, ((0, 0), (0, padw), (0, 0)))

    need = _block_vmem_bytes(tb, K, N, D, itemsize)
    vmem_limit = int(min(max(2 * need, 32 * 1024 * 1024), int(0.75 * vmem_cap)))

    kernel = functools.partial(
        _decoder_kernel,
        inv_temp=1.0 / float(temp_decoder),
        softmax_axis=softmax_axis,
        precision=precision,
    )

    out = pl.pallas_call(
        kernel,
        out_shape=jax.ShapeDtypeStruct((K, Bp, D), in_dtype),
        grid_spec=pltpu.PrefetchScalarGridSpec(
            num_scalar_prefetch=0,
            grid=(Bp // tb,),
            in_specs=[
                pl.BlockSpec((K, tb, D), lambda i: (0, i, 0)),   # text (original layout)
                pl.BlockSpec((N, tb, D), lambda i: (0, i, 0)),   # vision (original layout)
                pl.BlockSpec((N, D), lambda i: (0, 0)),          # pre-scaled pe, resident
            ],
            out_specs=pl.BlockSpec((K, tb, D), lambda i: (0, i, 0)),
        ),
        compiler_params=pltpu.CompilerParams(
            dimension_semantics=("parallel",),
            vmem_limit_bytes=vmem_limit),
    )(text, vision, pe_scaled)

    if Bp != B:
        out = out[:, :B, :]
    return out


def make_positional_encoding(max_length, d_model, dtype=jnp.float32):
    """Deterministic sinusoidal PE, identical to the module's __init__."""
    k = jnp.arange(max_length, dtype=jnp.float32)[:, None]                 # (L, 1)
    div_term = jnp.exp(jnp.arange(0, d_model, 2, dtype=jnp.float32)
                       * (-(math.log(10000.0) / d_model)))                 # (D/2,)
    pe = jnp.zeros((max_length, d_model), dtype=jnp.float32)
    pe = pe.at[:, 0::2].set(jnp.sin(k * div_term))
    pe = pe.at[:, 1::2].set(jnp.cos(k * div_term))
    return pe.astype(dtype)


def _reference(text, vision, pe, pos_alpha, temp, softmax_dim):
    N = vision.shape[0]
    vis_pe = vision + pos_alpha * pe[:N][:, None, :]
    s = jnp.einsum("kbd,nbd->bkn", text, vis_pe,
                   precision=lax.Precision.HIGHEST) / temp
    p = jax.nn.softmax(s, axis=softmax_dim)
    return jnp.einsum("nbd,bkn->kbd", vision, p,
                      precision=lax.Precision.HIGHEST)


if __name__ == "__main__":
    # Small shapes consistent with the module: text (K,B,D), vision (N,B,D).
    K, N, B, D = 8, 16, 2, 32
    POS_ALPHA = 0.5
    TEMP_DECODER = 0.07
    SOFTMAX_DIM_NAME = "patch"    # -> dim=2 of (B,K,N)

    key = jax.random.PRNGKey(0)
    k1, k2 = jax.random.split(key)
    text = jax.random.normal(k1, (K, B, D), dtype=jnp.float32)
    vision = jax.random.normal(k2, (N, B, D), dtype=jnp.float32)
    pe = make_positional_encoding(2048, D)

    out = shallow_decoder_forward(
        text, vision, pe,
        pos_alpha=POS_ALPHA, temp_decoder=TEMP_DECODER,
        decoder_softmax_dim=SOFTMAX_DIM_NAME)
    out = jax.block_until_ready(out)

    ref = _reference(text, vision, pe, POS_ALPHA, TEMP_DECODER, softmax_dim=2)
    assert out.shape == (K, B, D)
    max_err = float(jnp.max(jnp.abs(out - ref)))
    assert jnp.allclose(out, ref, atol=1e-3, rtol=1e-3), max_err

    print("KERNEL_OK")
</pallas_src>

<mosaic_0001>
module attributes {stable_mosaic.version = 11 : i64} {
  func.func @_decoder_kernel(%arg0: i32, %arg1: memref<8x2x32xf32, #tpu.memory_space<vmem>>, %arg2: memref<16x2x32xf32, #tpu.memory_space<vmem>>, %arg3: memref<16x32xf32, #tpu.memory_space<vmem>>, %arg4: memref<8x2x32xf32, #tpu.memory_space<vmem>>) attributes {dimension_semantics = [#tpu.dimension_semantics<parallel>], iteration_bounds = array<i64: 1>, scalar_prefetch = 0 : i64, scratch_operands = 0 : i64, tpu.core_type = #tpu.core_type<tc>, window_params = [{transform_indices = @transform_0, window_bounds = array<i64: 8, 2, 32>}, {transform_indices = @transform_1, window_bounds = array<i64: 16, 2, 32>}, {pipeline_mode = #tpu.pipeline_mode<synchronous>, transform_indices = @transform_2, window_bounds = array<i64: 16, 32>}, {transform_indices = @transform_3, window_bounds = array<i64: 8, 2, 32>}]} {
    %c0 = arith.constant 0 : index
    %c0_0 = arith.constant 0 : index
    %c0_1 = arith.constant 0 : index
    %0 = vector.load %arg1[%c0, %c0_0, %c0_1] : memref<8x2x32xf32, #tpu.memory_space<vmem>>, vector<8x2x32xf32>
    %1 = tpu.transpose %0, [1, 0, 2] : vector<8x2x32xf32> -> vector<2x8x32xf32>
    %c0_2 = arith.constant 0 : index
    %c0_3 = arith.constant 0 : index
    %c0_4 = arith.constant 0 : index
    %2 = vector.load %arg2[%c0_2, %c0_3, %c0_4] : memref<16x2x32xf32, #tpu.memory_space<vmem>>, vector<16x2x32xf32>
    %3 = tpu.transpose %2, [1, 0, 2] : vector<16x2x32xf32> -> vector<2x16x32xf32>
    %c0_5 = arith.constant 0 : index
    %c0_6 = arith.constant 0 : index
    %4 = vector.load %arg3[%c0_5, %c0_6] : memref<16x32xf32, #tpu.memory_space<vmem>>, vector<16x32xf32>
    %5 = vector.shape_cast %4 : vector<16x32xf32> to vector<1x16x32xf32>
    %6 = vector.broadcast %5 : vector<1x16x32xf32> to vector<2x16x32xf32>
    %7 = arith.addf %3, %6 : vector<2x16x32xf32>
    "tpu.trace_start"() <{level = 10 : i32, message = "bkd,bnd->bkn"}> : () -> ()
    %cst = arith.constant dense<0.000000e+00> : vector<2x8x16xf32>
    %8 = tpu.matmul %1, %7, %cst {dimension_numbers = #tpu.dot_dimension_numbers<[2], [2], [1], [1], [0, 0, 0, 1, 1, 1], [0], [0]>, precision = #tpu.contract_precision<fp32>} : vector<2x8x32xf32>, vector<2x16x32xf32>, vector<2x8x16xf32> -> vector<2x8x16xf32>
    "tpu.trace_stop"() : () -> ()
    %cst_7 = arith.constant 14.2857141 : f32
    %9 = vector.broadcast %cst_7 : f32 to vector<2x8x16xf32>
    %10 = arith.mulf %8, %9 : vector<2x8x16xf32>
    %cst_8 = arith.constant dense<0xFF800000> : vector<2x8xf32>
    %11 = vector.multi_reduction <maximumf>, %10, %cst_8 [2] : vector<2x8x16xf32> to vector<2x8xf32>
    %12 = vector.shape_cast %11 : vector<2x8xf32> to vector<2x8x1xf32>
    %13 = vector.broadcast %12 : vector<2x8x1xf32> to vector<2x8x16xf32>
    %14 = arith.subf %10, %13 : vector<2x8x16xf32>
    %15 = math.exp %14 : vector<2x8x16xf32>
    %cst_9 = arith.constant dense<0.000000e+00> : vector<2x8xf32>
    %16 = vector.multi_reduction <add>, %15, %cst_9 [2] : vector<2x8x16xf32> to vector<2x8xf32>
    %17 = vector.shape_cast %16 : vector<2x8xf32> to vector<2x8x1xf32>
    %18 = vector.broadcast %17 : vector<2x8x1xf32> to vector<2x8x16xf32>
    %19 = arith.divf %15, %18 : vector<2x8x16xf32>
    "tpu.trace_start"() <{level = 10 : i32, message = "bkn,bnd->bkd"}> : () -> ()
    %cst_10 = arith.constant dense<0.000000e+00> : vector<2x8x32xf32>
    %20 = tpu.matmul %19, %3, %cst_10 {dimension_numbers = #tpu.dot_dimension_numbers<[2], [1], [1], [2], [0, 0, 0, 1, 1, 2], [0], [0]>, precision = #tpu.contract_precision<fp32>} : vector<2x8x16xf32>, vector<2x16x32xf32>, vector<2x8x32xf32> -> vector<2x8x32xf32>
    "tpu.trace_stop"() : () -> ()
    %21 = tpu.transpose %20, [1, 0, 2] : vector<2x8x32xf32> -> vector<8x2x32xf32>
    %c0_11 = arith.constant 0 : index
    %c0_12 = arith.constant 0 : index
    %c0_13 = arith.constant 0 : index
    %22 = vector.load %arg4[%c0_11, %c0_12, %c0_13] : memref<8x2x32xf32, #tpu.memory_space<vmem>>, vector<8x2x32xf32>
    tpu.vector_store %arg4[%c0_11, %c0_12, %c0_13], %21 {strides = array<i32>} : memref<8x2x32xf32, #tpu.memory_space<vmem>>, vector<8x2x32xf32>,
    return
  }
  func.func @transform_0(%arg0: i32) -> (i32, i32, i32) {
    %c0_i32 = arith.constant 0 : i32
    %c0_i32_0 = arith.constant 0 : i32
    %c0_i32_1 = arith.constant 0 : i32
    return %c0_i32, %arg0, %c0_i32_0 : i32, i32, i32
  }
  func.func @transform_1(%arg0: i32) -> (i32, i32, i32) {
    %c0_i32 = arith.constant 0 : i32
    %c0_i32_0 = arith.constant 0 : i32
    %c0_i32_1 = arith.constant 0 : i32
    return %c0_i32, %arg0, %c0_i32_0 : i32, i32, i32
  }
  func.func @transform_2(%arg0: i32) -> (i32, i32) {
    %c0_i32 = arith.constant 0 : i32
    %c0_i32_0 = arith.constant 0 : i32
    %c0_i32_1 = arith.constant 0 : i32
    return %c0_i32, %c0_i32_0 : i32, i32
  }
  func.func @transform_3(%arg0: i32) -> (i32, i32, i32) {
    %c0_i32 = arith.constant 0 : i32
    %c0_i32_0 = arith.constant 0 : i32
    %c0_i32_1 = arith.constant 0 : i32
    return %c0_i32, %arg0, %c0_i32_0 : i32, i32, i32
  }
}

</mosaic_0001>

<llo_original>
// kernel: tpu_custom_call.1
$region0: #{tpu_custom_call.1}
  #allocation0 [shape = 'u32[]', space=smem, size = 0x4, offset = 0x4, fixed_abs, tag = 'smem constant byte address 0x4 - core index']
  #allocation1 [shape = 'u32[144,128]{1,0:T(1,128)}', space=vmem, size = 0x12000, scoped, tag = 'internal scratch']
  %s0 = inlined_call_operand.hbm [shape: f32[8,2,32], index: 0, kind: input, shape index: {}]
  %s1 = inlined_call_operand.hbm [shape: f32[16,2,32], index: 1, kind: input, shape index: {}]
  %s2 = inlined_call_operand.hbm [shape: f32[16,32], index: 2, kind: input, shape index: {}]
  %s3 = inlined_call_operand.hbm [shape: f32[8,2,32], index: 3, kind: output, shape index: {}]
  %s4 = sld [smem:[#allocation0]]
  $region34: #{tpu_custom_call.1} parent=0
    _
  %s6 = ssub.s32 1, %s4
  %s7 = scalar_select 0, %s6, %s4
  $region1: #{tpu_custom_call.1} parent=0
    #allocation2 [shape = 'u8[8192]{0}', space=vmem, size = 0x2000, scoped, tag = 'input window, operand 0, single buffered']
    #allocation3 [shape = 's32[1]{0}', space=sflag, size = 0x4, scoped, tag = 'scoped memory for tpu_custom_call.1']
    #allocation4 [shape = 's32[1]{0}', space=sflag, size = 0x4, scoped, tag = 'scoped memory for tpu_custom_call.1']
    #allocation5 [shape = 'u8[16384]{0}', space=vmem, size = 0x4000, scoped, tag = 'input window, operand 1, single buffered']
    #allocation6 [shape = 's32[1]{0}', space=sflag, size = 0x4, scoped, tag = 'scoped memory for tpu_custom_call.1']
    #allocation7 [shape = 'u8[8192]{0}', space=vmem, size = 0x2000, scoped, tag = 'input window, operand 2, single buffered']
    #allocation8 [shape = 'u8[8192]{0}', space=vmem, size = 0x2000, scoped, tag = 'output window, operand 0, single buffered']
    %8 = vsyncpa [#allocation3], 0
    %9 = vsyncpa [#allocation6], 0
    %10 = vsyncpa [#allocation4], 0
    // Predicated region
    $region2: #{tpu_custom_call.1} parent=1 // pred_check
      _
    $region3: #{tpu_custom_call.1} parent=1 // pred_check_branch
      %12 = sbr.rel (0) target = $region5
    $region4: #{tpu_custom_call.1} parent=1 // pred_region
      %s14 = ssub.s32 256, 256
      %15 = vsyncadd [#allocation3], %s14
      %s16 = sshll.u32 [#allocation2], 4
      %s17 = int_to_ptr.vmem [resolvable:$true] %s16
      %22 = dma.hbm_to_vmem [thread:$0]  %s0, 256, %s17, [#allocation3], 32, 32, 2
    $region5: #{tpu_custom_call.1} parent=1 // pred_fallthru
      _
    // Predicated region
    $region6: #{tpu_custom_call.1} parent=1 // pred_check
      _
    $region7: #{tpu_custom_call.1} parent=1 // pred_check_branch
      %24 = sbr.rel (0) target = $region9
    $region8: #{tpu_custom_call.1} parent=1 // pred_region
      %s26 = ssub.s32 512, 512
      %27 = vsyncadd [#allocation6], %s26
      %s28 = sshll.u32 [#allocation5], 4
      %s29 = int_to_ptr.vmem [resolvable:$true] %s28
      %34 = dma.hbm_to_vmem [thread:$0]  %s1, 512, %s29, [#allocation6], 32, 32, 2
    $region9: #{tpu_custom_call.1} parent=1 // pred_fallthru
      _
    // Predicated region
    $region10: #{tpu_custom_call.1} parent=1 // pred_check
      _
    $region11: #{tpu_custom_call.1} parent=1 // pred_check_branch
      %36 = sbr.rel (0) target = $region13
    $region12: #{tpu_custom_call.1} parent=1 // pred_region
      %s38 = ssub.s32 256, 256
      %39 = vsyncadd [#allocation6], %s38
      %s40 = sshll.u32 [#allocation7], 4
      %s41 = int_to_ptr.vmem [resolvable:$true] %s40
      %46 = dma.hbm_to_vmem [thread:$0]  %s2, 256, %s41, [#allocation6], 128, 128, 8
    $region13: #{tpu_custom_call.1} parent=1 // pred_fallthru
      _
    // Predicated region
    $region14: #{tpu_custom_call.1} parent=1 // pred_check
      _
    $region15: #{tpu_custom_call.1} parent=1 // pred_check_branch
      %48 = sbr.rel (0) target = $region17
    $region16: #{tpu_custom_call.1} parent=1 // pred_region
      %49 = dma.done [#allocation3], 256
    $region17: #{tpu_custom_call.1} parent=1 // pred_fallthru
      _
    // Predicated region
    $region18: #{tpu_custom_call.1} parent=1 // pred_check
      _
    $region19: #{tpu_custom_call.1} parent=1 // pred_check_branch
      %51 = sbr.rel (0) target = $region21
    $region20: #{tpu_custom_call.1} parent=1 // pred_region
      %52 = dma.done [#allocation6], 512
    $region21: #{tpu_custom_call.1} parent=1 // pred_fallthru
      _
    // Predicated region
    $region22: #{tpu_custom_call.1} parent=1 // pred_check
      _
    $region23: #{tpu_custom_call.1} parent=1 // pred_check_branch
      %54 = sbr.rel (0) target = $region25
    $region24: #{tpu_custom_call.1} parent=1 // pred_region
      %55 = dma.done [#allocation6], 256
    $region25: #{tpu_custom_call.1} parent=1 // pred_fallthru
      _
    %v56 = vld [vmem:[#allocation2] sm:$0x3]
    %v57 = vld [vmem:[#allocation2 + $0x2] sm:$0x3]
    %v58 = vld [vmem:[#allocation2 + $0x4] sm:$0x3]
    %v59 = vld [vmem:[#allocation2 + $0x6] sm:$0x3]
    %v60 = vld [vmem:[#allocation2 + $0x8] sm:$0x3]
    %v61 = vld [vmem:[#allocation2 + $0xa] sm:$0x3]
    %v62 = vld [vmem:[#allocation2 + $0xc] sm:$0x3]
    %v63 = vld [vmem:[#allocation2 + $0xe] sm:$0x3]
    %v64 = vcombine.low %v56, %v58
    %v66 = vunpack.c.l.s4 1983009808
    %v67 = vunpack.c.0.s8 %v66
    %v68 = vlaneseq
    %v69 = vshrl.u32 %v68, 7
    %v70 = vsub.s32 %v67, %v69
    %v71 = vrot.slane %v64, %v70
    %v72 = vcombine.low %v57, %v59
    %v74 = vunpack.c.l.s4 1983009808
    %v75 = vunpack.c.0.s8 %v74
    %v76 = vlaneseq
    %v77 = vshrl.u32 %v76, 7
    %v78 = vsub.s32 %v75, %v77
    %v79 = vrot.slane %v72, %v78
    %v80 = vcombine.low %v60, %v62
    %v82 = vunpack.c.l.s4 1983009808
    %v83 = vunpack.c.0.s8 %v82
    %v84 = vlaneseq
    %v85 = vshrl.u32 %v84, 7
    %v86 = vsub.s32 %v83, %v85
    %v87 = vrot.slane %v80, %v86
    %v88 = vcombine.low %v61, %v63
    %v90 = vunpack.c.l.s4 1983009808
    %v91 = vunpack.c.0.s8 %v90
    %v92 = vlaneseq
    %v93 = vshrl.u32 %v92, 7
    %v94 = vsub.s32 %v91, %v93
    %v95 = vrot.slane %v88, %v94
    %v96 = vcombine.low %v71, %v79
    %v98 = vunpack.c.l.s4 1934713408
    %v99 = vunpack.c.0.s8 %v98
    %v100 = vlaneseq
    %v101 = vshrl.u32 %v100, 7
    %v102 = vsub.s32 %v99, %v101
    %v103 = vrot.slane %v96, %v102
    %v104 = vcombine.low %v87, %v95
    %v106 = vunpack.c.l.s4 1934713408
    %v107 = vunpack.c.0.s8 %v106
    %v108 = vlaneseq
    %v109 = vshrl.u32 %v108, 7
    %v110 = vsub.s32 %v107, %v109
    %v111 = vrot.slane %v104, %v110
    %v112 = vcombine.low %v103, %v111
    %v113 = vcombine.high %v103, %v111
    %v114 = vld [vmem:[#allocation5] sm:$0x3]
    %v115 = vld [vmem:[#allocation5 + $0x2] sm:$0x3]
    %v116 = vld [vmem:[#allocation5 + $0x4] sm:$0x3]
    %v117 = vld [vmem:[#allocation5 + $0x6] sm:$0x3]
    %v118 = vld [vmem:[#allocation5 + $0x8] sm:$0x3]
    %v119 = vld [vmem:[#allocation5 + $0xa] sm:$0x3]
    %v120 = vld [vmem:[#allocation5 + $0xc] sm:$0x3]
    %v121 = vld [vmem:[#allocation5 + $0xe] sm:$0x3]
    %v122 = vld [vmem:[#allocation5 + $0x10] sm:$0x3]
    %v123 = vld [vmem:[#allocation5 + $0x12] sm:$0x3]
    %v124 = vld [vmem:[#allocation5 + $0x14] sm:$0x3]
    %v125 = vld [vmem:[#allocation5 + $0x16] sm:$0x3]
    %v126 = vld [vmem:[#allocation5 + $0x18] sm:$0x3]
    %v127 = vld [vmem:[#allocation5 + $0x1a] sm:$0x3]
    %v128 = vld [vmem:[#allocation5 + $0x1c] sm:$0x3]
    %v129 = vld [vmem:[#allocation5 + $0x1e] sm:$0x3]
    %v130 = vcombine.low %v114, %v116
    %v132 = vunpack.c.l.s4 1983009808
    %v133 = vunpack.c.0.s8 %v132
    %v134 = vlaneseq
    %v135 = vshrl.u32 %v134, 7
    %v136 = vsub.s32 %v133, %v135
    %v137 = vrot.slane %v130, %v136
    %v138 = vcombine.low %v115, %v117
    %v140 = vunpack.c.l.s4 1983009808
    %v141 = vunpack.c.0.s8 %v140
    %v142 = vlaneseq
    %v143 = vshrl.u32 %v142, 7
    %v144 = vsub.s32 %v141, %v143
    %v145 = vrot.slane %v138, %v144
    %v146 = vcombine.low %v118, %v120
    %v148 = vunpack.c.l.s4 1983009808
    %v149 = vunpack.c.0.s8 %v148
    %v150 = vlaneseq
    %v151 = vshrl.u32 %v150, 7
    %v152 = vsub.s32 %v149, %v151
    %v153 = vrot.slane %v146, %v152
    %v154 = vcombine.low %v119, %v121
    %v156 = vunpack.c.l.s4 1983009808
    %v157 = vunpack.c.0.s8 %v156
    %v158 = vlaneseq
    %v159 = vshrl.u32 %v158, 7
    %v160 = vsub.s32 %v157, %v159
    %v161 = vrot.slane %v154, %v160
    %v162 = vcombine.low %v137, %v145
    %v164 = vunpack.c.l.s4 1934713408
    %v165 = vunpack.c.0.s8 %v164
    %v166 = vlaneseq
    %v167 = vshrl.u32 %v166, 7
    %v168 = vsub.s32 %v165, %v167
    %v169 = vrot.slane %v162, %v168
    %v170 = vcombine.low %v153, %v161
    %v172 = vunpack.c.l.s4 1934713408
    %v173 = vunpack.c.0.s8 %v172
    %v174 = vlaneseq
    %v175 = vshrl.u32 %v174, 7
    %v176 = vsub.s32 %v173, %v175
    %v177 = vrot.slane %v170, %v176
    %v178 = vcombine.low %v169, %v177
    %v179 = vcombine.high %v169, %v177
    %v180 = vcombine.low %v122, %v124
    %v182 = vunpack.c.l.s4 1983009808
    %v183 = vunpack.c.0.s8 %v182
    %v184 = vlaneseq
    %v185 = vshrl.u32 %v184, 7
    %v186 = vsub.s32 %v183, %v185
    %v187 = vrot.slane %v180, %v186
    %v188 = vcombine.low %v123, %v125
    %v190 = vunpack.c.l.s4 1983009808
    %v191 = vunpack.c.0.s8 %v190
    %v192 = vlaneseq
    %v193 = vshrl.u32 %v192, 7
    %v194 = vsub.s32 %v191, %v193
    %v195 = vrot.slane %v188, %v194
    %v196 = vcombine.low %v126, %v128
    %v198 = vunpack.c.l.s4 1983009808
    %v199 = vunpack.c.0.s8 %v198
    %v200 = vlaneseq
    %v201 = vshrl.u32 %v200, 7
    %v202 = vsub.s32 %v199, %v201
    %v203 = vrot.slane %v196, %v202
    %v204 = vcombine.low %v127, %v129
    %v206 = vunpack.c.l.s4 1983009808
    %v207 = vunpack.c.0.s8 %v206
    %v208 = vlaneseq
    %v209 = vshrl.u32 %v208, 7
    %v210 = vsub.s32 %v207, %v209
    %v211 = vrot.slane %v204, %v210
    %v212 = vcombine.low %v187, %v195
    %v214 = vunpack.c.l.s4 1934713408
    %v215 = vunpack.c.0.s8 %v214
    %v216 = vlaneseq
    %v217 = vshrl.u32 %v216, 7
    %v218 = vsub.s32 %v215, %v217
    %v219 = vrot.slane %v212, %v218
    %v220 = vcombine.low %v203, %v211
    %v222 = vunpack.c.l.s4 1934713408
    %v223 = vunpack.c.0.s8 %v222
    %v224 = vlaneseq
    %v225 = vshrl.u32 %v224, 7
    %v226 = vsub.s32 %v223, %v225
    %v227 = vrot.slane %v220, %v226
    %v228 = vcombine.low %v219, %v227
    %v229 = vcombine.high %v219, %v227
    %v230 = vld [vmem:[#allocation7] sm:$0xff]
    %v231 = vld [vmem:[#allocation7 + $0x8] sm:$0xff]
    %v232 = vadd.f32 %v178, %v230
    %v233 = vadd.f32 %v228, %v231
    %v234 = vadd.f32 %v179, %v230
    %v235 = vadd.f32 %v229, %v231
    %vm236 = vcmask 261120
    %v238 = vsel %vm236, %v112, 0
    %v241 = vsel %vm236, %v232, 0
    %v244 = vsel %vm236, %v233, 0
    %246 = vmatprep.subr.mxu0 0.0
    %v247 = vand.u32 %v241, 4294901760
    %248 = vmatpush1.xpose.msra.mxu0 %v247
    %249 = vmatprep.subr.mxu0 0.0
    %v250 = vand.u32 %v244, 4294901760
    %251 = vmatpush1.xpose.msra.mxu0 %v250
    %252 = vmatprep.subr.mxu0 0.0
    %253 = vmatpush1.xpose.msra.mxu0 0.0
    %254 = vmatprep.subr.mxu0 0.0
    %255 = vmatpush1.xpose.msra.mxu0 0.0
    %256 = vmatprep.subr.mxu0 0.0
    %257 = vmatpush1.xpose.msra.mxu0 0.0
    %258 = vmatprep.subr.mxu0 0.0
    %259 = vmatpush1.xpose.msra.mxu0 0.0
    %260 = vmatprep.subr.mxu0 0.0
    %261 = vmatpush1.xpose.msra.mxu0 0.0
    %262 = vmatprep.subr.mxu0 0.0
    %263 = vmatpush1.xpose.msra.mxu0 0.0
    %264 = vmatprep.subr.mxu0 0.0
    %265 = vmatpush1.xpose.msra.mxu0 0.0
    %266 = vmatprep.subr.mxu0 0.0
    %267 = vmatpush1.xpose.msra.mxu0 0.0
    %268 = vmatprep.subr.mxu0 0.0
    %269 = vmatpush1.xpose.msra.mxu0 0.0
    %270 = vmatprep.subr.mxu0 0.0
    %271 = vmatpush1.xpose.msra.mxu0 0.0
    %272 = vmatprep.subr.mxu0 0.0
    %273 = vmatpush1.xpose.msra.mxu0 0.0
    %274 = vmatprep.subr.mxu0 0.0
    %275 = vmatpush1.xpose.msra.mxu0 0.0
    %276 = vmatprep.subr.mxu0 0.0
    %277 = vmatpush1.xpose.msra.mxu0 0.0
    %278 = vmatprep.subr.mxu0 0.0
    %279 = vmatpush1.xpose.msra.mxu0 0.0
    %280 = vmatprep.subr.mxu0 0.0
    %281 = vmatpush1.xpose.msra.mxu0 0.0
    %282 = vmatprep.subr.mxu0 0.0
    %283 = vmatpush1.xpose.msra.mxu0 0.0
    %284 = vmatprep.subr.mxu0 0.0
    %285 = vmatpush1.xpose.msra.mxu0 0.0
    %286 = vmatprep.subr.mxu0 0.0
    %287 = vmatpush1.xpose.msra.mxu0 0.0
    %288 = vmatprep.subr.mxu0 0.0
    %289 = vmatpush1.xpose.msra.mxu0 0.0
    %290 = vmatprep.subr.mxu0 0.0
    %291 = vmatpush1.xpose.msra.mxu0 0.0
    %292 = vmatprep.subr.mxu0 0.0
    %293 = vmatpush1.xpose.msra.mxu0 0.0
    %294 = vmatprep.subr.mxu0 0.0
    %295 = vmatpush1.xpose.msra.mxu0 0.0
    %296 = vmatprep.subr.mxu0 0.0
    %297 = vmatpush1.xpose.msra.mxu0 0.0
    %298 = vmatprep.subr.mxu0 0.0
    %299 = vmatpush1.xpose.msra.mxu0 0.0
    %300 = vmatprep.subr.mxu0 0.0
    %301 = vmatpush1.xpose.msra.mxu0 0.0
    %302 = vmatprep.subr.mxu0 0.0
    %303 = vmatpush1.xpose.msra.mxu0 0.0
    %304 = vmatprep.subr.mxu0 0.0
    %305 = vmatpush1.xpose.msra.mxu0 0.0
    %306 = vmatprep.subr.mxu0 0.0
    %307 = vmatpush1.xpose.msra.mxu0 0.0
    %308 = vmatprep.subr.mxu0 0.0
    %309 = vmatpush1.xpose.msra.mxu0 0.0
    %310 = vmatprep.subr.mxu0 0.0
    %311 = vmatpush1.xpose.msra.mxu0 0.0
    %312 = vmatprep.mubr.f32.mxu0 0.0
    %v313 = vand.u32 %v238, 4294901760
    %v314 = vsub.f32 %v238, %v313
    %v315 = vand.u32 %v314, 4294901760
    %v316 = vsub.f32 %v314, %v315
    %v317 = vand.u32 %v316, 4294901760
    %318 = vmatmul.mubr.f32.gmra.mrb[0].mxu0 %v317
    %v319 = vpop.f32.mrb[0].mxu0
    %v320 = vadd.f32 0.0, %v319
    %v321 = vpop.f32.mrb[0].mxu0
    %322 = vdwg.mxu0
    %323 = vmatprep.subr.mxu0 0.0
    %v324 = vand.u32 %v241, 4294901760
    %v325 = vsub.f32 %v241, %v324
    %v326 = vand.u32 %v325, 4294901760
    %v327 = vsub.f32 %v325, %v326
    %v328 = vand.u32 %v327, 4294901760
    %329 = vmatpush1.xpose.msra.mxu0 %v328
    %330 = vmatprep.subr.mxu0 0.0
    %v331 = vand.u32 %v244, 4294901760
    %v332 = vsub.f32 %v244, %v331
    %v333 = vand.u32 %v332, 4294901760
    %v334 = vsub.f32 %v332, %v333
    %v335 = vand.u32 %v334, 4294901760
    %336 = vmatpush1.xpose.msra.mxu0 %v335
    %337 = vmatprep.subr.mxu0 0.0
    %338 = vmatpush1.xpose.msra.mxu0 0.0
    %339 = vmatprep.subr.mxu0 0.0
    %340 = vmatpush1.xpose.msra.mxu0 0.0
    %341 = vmatprep.subr.mxu0 0.0
    %342 = vmatpush1.xpose.msra.mxu0 0.0
    %343 = vmatprep.subr.mxu0 0.0
    %344 = vmatpush1.xpose.msra.mxu0 0.0
    %345 = vmatprep.subr.mxu0 0.0
    %346 = vmatpush1.xpose.msra.mxu0 0.0
    %347 = vmatprep.subr.mxu0 0.0
    %348 = vmatpush1.xpose.msra.mxu0 0.0
    %349 = vmatprep.subr.mxu0 0.0
    %350 = vmatpush1.xpose.msra.mxu0 0.0
    %351 = vmatprep.subr.mxu0 0.0
    %352 = vmatpush1.xpose.msra.mxu0 0.0
    %353 = vmatprep.subr.mxu0 0.0
    %354 = vmatpush1.xpose.msra.mxu0 0.0
    %355 = vmatprep.subr.mxu0 0.0
    %356 = vmatpush1.xpose.msra.mxu0 0.0
    %357 = vmatprep.subr.mxu0 0.0
    %358 = vmatpush1.xpose.msra.mxu0 0.0
    %359 = vmatprep.subr.mxu0 0.0
    %360 = vmatpush1.xpose.msra.mxu0 0.0
    %361 = vmatprep.subr.mxu0 0.0
    %362 = vmatpush1.xpose.msra.mxu0 0.0
    %363 = vmatprep.subr.mxu0 0.0
    %364 = vmatpush1.xpose.msra.mxu0 0.0
    %365 = vmatprep.subr.mxu0 0.0
    %366 = vmatpush1.xpose.msra.mxu0 0.0
    %367 = vmatprep.subr.mxu0 0.0
    %368 = vmatpush1.xpose.msra.mxu0 0.0
    %369 = vmatprep.subr.mxu0 0.0
    %370 = vmatpush1.xpose.msra.mxu0 0.0
    %371 = vmatprep.subr.mxu0 0.0
    %372 = vmatpush1.xpose.msra.mxu0 0.0
    %373 = vmatprep.subr.mxu0 0.0
    %374 = vmatpush1.xpose.msra.mxu0 0.0
    %375 = vmatprep.subr.mxu0 0.0
    %376 = vmatpush1.xpose.msra.mxu0 0.0
    %377 = vmatprep.subr.mxu0 0.0
    %378 = vmatpush1.xpose.msra.mxu0 0.0
    %379 = vmatprep.subr.mxu0 0.0
    %380 = vmatpush1.xpose.msra.mxu0 0.0
    %381 = vmatprep.subr.mxu0 0.0
    %382 = vmatpush1.xpose.msra.mxu0 0.0
    %383 = vmatprep.subr.mxu0 0.0
    %384 = vmatpush1.xpose.msra.mxu0 0.0
    %385 = vmatprep.subr.mxu0 0.0
    %386 = vmatpush1.xpose.msra.mxu0 0.0
    %387 = vmatprep.subr.mxu0 0.0
    %388 = vmatpush1.xpose.msra.mxu0 0.0
    %389 = vmatprep.subr.mxu0 0.0
    %390 = vmatpush1.xpose.msra.mxu0 0.0
    %391 = vmatprep.subr.mxu0 0.0
    %392 = vmatpush1.xpose.msra.mxu0 0.0
    %393 = vmatprep.subr.mxu0 0.0
    %394 = vmatpush1.xpose.msra.mxu0 0.0
    %395 = vmatprep.subr.mxu0 0.0
    %396 = vmatpush1.xpose.msra.mxu0 0.0
    %397 = vmatprep.mubr.f32.mxu0 0.0
    %v398 = vand.u32 %v238, 4294901760
    %399 = vmatmul.mubr.f32.gmra.mrb[0].mxu0 %v398
    %v400 = vpop.f32.mrb[0].mxu0
    %v401 = vadd.f32 %v320, %v400
    %v402 = vpop.f32.mrb[0].mxu0
    %403 = vdwg.mxu0
    %404 = vmatprep.subr.mxu0 0.0
    %v405 = vand.u32 %v241, 4294901760
    %v406 = vsub.f32 %v241, %v405
    %407 = vmatpush1.xpose.msra.mxu0 %v406
    %408 = vmatprep.subr.mxu0 0.0
    %v409 = vand.u32 %v244, 4294901760
    %v410 = vsub.f32 %v244, %v409
    %411 = vmatpush1.xpose.msra.mxu0 %v410
    %412 = vmatprep.subr.mxu0 0.0
    %413 = vmatpush1.xpose.msra.mxu0 0.0
    %414 = vmatprep.subr.mxu0 0.0
    %415 = vmatpush1.xpose.msra.mxu0 0.0
    %416 = vmatprep.subr.mxu0 0.0
    %417 = vmatpush1.xpose.msra.mxu0 0.0
    %418 = vmatprep.subr.mxu0 0.0
    %419 = vmatpush1.xpose.msra.mxu0 0.0
    %420 = vmatprep.subr.mxu0 0.0
    %421 = vmatpush1.xpose.msra.mxu0 0.0
    %422 = vmatprep.subr.mxu0 0.0
    %423 = vmatpush1.xpose.msra.mxu0 0.0
    %424 = vmatprep.subr.mxu0 0.0
    %425 = vmatpush1.xpose.msra.mxu0 0.0
    %426 = vmatprep.subr.mxu0 0.0
    %427 = vmatpush1.xpose.msra.mxu0 0.0
    %428 = vmatprep.subr.mxu0 0.0
    %429 = vmatpush1.xpose.msra.mxu0 0.0
    %430 = vmatprep.subr.mxu0 0.0
    %431 = vmatpush1.xpose.msra.mxu0 0.0
    %432 = vmatprep.subr.mxu0 0.0
    %433 = vmatpush1.xpose.msra.mxu0 0.0
    %434 = vmatprep.subr.mxu0 0.0
    %435 = vmatpush1.xpose.msra.mxu0 0.0
    %436 = vmatprep.subr.mxu0 0.0
    %437 = vmatpush1.xpose.msra.mxu0 0.0
    %438 = vmatprep.subr.mxu0 0.0
    %439 = vmatpush1.xpose.msra.mxu0 0.0
    %440 = vmatprep.subr.mxu0 0.0
    %441 = vmatpush1.xpose.msra.mxu0 0.0
    %442 = vmatprep.subr.mxu0 0.0
    %443 = vmatpush1.xpose.msra.mxu0 0.0
    %444 = vmatprep.subr.mxu0 0.0
    %445 = vmatpush1.xpose.msra.mxu0 0.0
    %446 = vmatprep.subr.mxu0 0.0
    %447 = vmatpush1.xpose.msra.mxu0 0.0
    %448 = vmatprep.subr.mxu0 0.0
    %449 = vmatpush1.xpose.msra.mxu0 0.0
    %450 = vmatprep.subr.mxu0 0.0
    %451 = vmatpush1.xpose.msra.mxu0 0.0
    %452 = vmatprep.subr.mxu0 0.0
    %453 = vmatpush1.xpose.msra.mxu0 0.0
    %454 = vmatprep.subr.mxu0 0.0
    %455 = vmatpush1.xpose.msra.mxu0 0.0
    %456 = vmatprep.subr.mxu0 0.0
    %457 = vmatpush1.xpose.msra.mxu0 0.0
    %458 = vmatprep.subr.mxu0 0.0
    %459 = vmatpush1.xpose.msra.mxu0 0.0
    %460 = vmatprep.subr.mxu0 0.0
    %461 = vmatpush1.xpose.msra.mxu0 0.0
    %462 = vmatprep.subr.mxu0 0.0
    %463 = vmatpush1.xpose.msra.mxu0 0.0
    %464 = vmatprep.subr.mxu0 0.0
    %465 = vmatpush1.xpose.msra.mxu0 0.0
    %466 = vmatprep.subr.mxu0 0.0
    %467 = vmatpush1.xpose.msra.mxu0 0.0
    %468 = vmatprep.subr.mxu0 0.0
    %469 = vmatpush1.xpose.msra.mxu0 0.0
    %470 = vmatprep.subr.mxu0 0.0
    %471 = vmatpush1.xpose.msra.mxu0 0.0
    %472 = vmatprep.mubr.f32.mxu0 0.0
    %v473 = vand.u32 %v238, 4294901760
    %v474 = vsub.f32 %v238, %v473
    %475 = vmatmul.mubr.f32.gmra.mrb[0].mxu0 %v474
    %v476 = vpop.f32.mrb[0].mxu0
    %v477 = vadd.f32 %v401, %v476
    %v478 = vpop.f32.mrb[0].mxu0
    %479 = vdwg.mxu0
    %480 = vmatprep.subr.mxu0 0.0
    %v481 = vand.u32 %v241, 4294901760
    %482 = vmatpush1.xpose.msra.mxu0 %v481
    %483 = vmatprep.subr.mxu0 0.0
    %v484 = vand.u32 %v244, 4294901760
    %485 = vmatpush1.xpose.msra.mxu0 %v484
    %486 = vmatprep.subr.mxu0 0.0
    %487 = vmatpush1.xpose.msra.mxu0 0.0
    %488 = vmatprep.subr.mxu0 0.0
    %489 = vmatpush1.xpose.msra.mxu0 0.0
    %490 = vmatprep.subr.mxu0 0.0
    %491 = vmatpush1.xpose.msra.mxu0 0.0
    %492 = vmatprep.subr.mxu0 0.0
    %493 = vmatpush1.xpose.msra.mxu0 0.0
    %494 = vmatprep.subr.mxu0 0.0
    %495 = vmatpush1.xpose.msra.mxu0 0.0
    %496 = vmatprep.subr.mxu0 0.0
    %497 = vmatpush1.xpose.msra.mxu0 0.0
    %498 = vmatprep.subr.mxu0 0.0
    %499 = vmatpush1.xpose.msra.mxu0 0.0
    %500 = vmatprep.subr.mxu0 0.0
    %501 = vmatpush1.xpose.msra.mxu0 0.0
    %502 = vmatprep.subr.mxu0 0.0
    %503 = vmatpush1.xpose.msra.mxu0 0.0
    %504 = vmatprep.subr.mxu0 0.0
    %505 = vmatpush1.xpose.msra.mxu0 0.0
    %506 = vmatprep.subr.mxu0 0.0
    %507 = vmatpush1.xpose.msra.mxu0 0.0
    %508 = vmatprep.subr.mxu0 0.0
    %509 = vmatpush1.xpose.msra.mxu0 0.0
    %510 = vmatprep.subr.mxu0 0.0
    %511 = vmatpush1.xpose.msra.mxu0 0.0
    %512 = vmatprep.subr.mxu0 0.0
    %513 = vmatpush1.xpose.msra.mxu0 0.0
    %514 = vmatprep.subr.mxu0 0.0
    %515 = vmatpush1.xpose.msra.mxu0 0.0
    %516 = vmatprep.subr.mxu0 0.0
    %517 = vmatpush1.xpose.msra.mxu0 0.0
    %518 = vmatprep.subr.mxu0 0.0
    %519 = vmatpush1.xpose.msra.mxu0 0.0
    %520 = vmatprep.subr.mxu0 0.0
    %521 = vmatpush1.xpose.msra.mxu0 0.0
    %522 = vmatprep.subr.mxu0 0.0
    %523 = vmatpush1.xpose.msra.mxu0 0.0
    %524 = vmatprep.subr.mxu0 0.0
    %525 = vmatpush1.xpose.msra.mxu0 0.0
    %526 = vmatprep.subr.mxu0 0.0
    %527 = vmatpush1.xpose.msra.mxu0 0.0
    %528 = vmatprep.subr.mxu0 0.0
    %529 = vmatpush1.xpose.msra.mxu0 0.0
    %530 = vmatprep.subr.mxu0 0.0
    %531 = vmatpush1.xpose.msra.mxu0 0.0
    %532 = vmatprep.subr.mxu0 0.0
    %533 = vmatpush1.xpose.msra.mxu0 0.0
    %534 = vmatprep.subr.mxu0 0.0
    %535 = vmatpush1.xpose.msra.mxu0 0.0
    %536 = vmatprep.subr.mxu0 0.0
    %537 = vmatpush1.xpose.msra.mxu0 0.0
    %538 = vmatprep.subr.mxu0 0.0
    %539 = vmatpush1.xpose.msra.mxu0 0.0
    %540 = vmatprep.subr.mxu0 0.0
    %541 = vmatpush1.xpose.msra.mxu0 0.0
    %542 = vmatprep.subr.mxu0 0.0
    %543 = vmatpush1.xpose.msra.mxu0 0.0
    %544 = vmatprep.subr.mxu0 0.0
    %545 = vmatpush1.xpose.msra.mxu0 0.0
    %546 = vmatprep.mubr.f32.mxu0 0.0
    %v547 = vand.u32 %v238, 4294901760
    %v548 = vsub.f32 %v238, %v547
    %v549 = vand.u32 %v548, 4294901760
    %550 = vmatmul.mubr.f32.gmra.mrb[0].mxu0 %v549
    %v551 = vpop.f32.mrb[0].mxu0
    %v552 = vadd.f32 %v477, %v551
    %v553 = vpop.f32.mrb[0].mxu0
    %554 = vdwg.mxu0
    %555 = vmatprep.subr.mxu0 0.0
    %v556 = vand.u32 %v241, 4294901760
    %v557 = vsub.f32 %v241, %v556
    %v558 = vand.u32 %v557, 4294901760
    %559 = vmatpush1.xpose.msra.mxu0 %v558
    %560 = vmatprep.subr.mxu0 0.0
    %v561 = vand.u32 %v244, 4294901760
    %v562 = vsub.f32 %v244, %v561
    %v563 = vand.u32 %v562, 4294901760
    %564 = vmatpush1.xpose.msra.mxu0 %v563
    %565 = vmatprep.subr.mxu0 0.0
    %566 = vmatpush1.xpose.msra.mxu0 0.0
    %567 = vmatprep.subr.mxu0 0.0
    %568 = vmatpush1.xpose.msra.mxu0 0.0
    %569 = vmatprep.subr.mxu0 0.0
    %570 = vmatpush1.xpose.msra.mxu0 0.0
    %571 = vmatprep.subr.mxu0 0.0
    %572 = vmatpush1.xpose.msra.mxu0 0.0
    %573 = vmatprep.subr.mxu0 0.0
    %574 = vmatpush1.xpose.msra.mxu0 0.0
    %575 = vmatprep.subr.mxu0 0.0
    %576 = vmatpush1.xpose.msra.mxu0 0.0
    %577 = vmatprep.subr.mxu0 0.0
    %578 = vmatpush1.xpose.msra.mxu0 0.0
    %579 = vmatprep.subr.mxu0 0.0
    %580 = vmatpush1.xpose.msra.mxu0 0.0
    %581 = vmatprep.subr.mxu0 0.0
    %582 = vmatpush1.xpose.msra.mxu0 0.0
    %583 = vmatprep.subr.mxu0 0.0
    %584 = vmatpush1.xpose.msra.mxu0 0.0
    %585 = vmatprep.subr.mxu0 0.0
    %586 = vmatpush1.xpose.msra.mxu0 0.0
    %587 = vmatprep.subr.mxu0 0.0
    %588 = vmatpush1.xpose.msra.mxu0 0.0
    %589 = vmatprep.subr.mxu0 0.0
    %590 = vmatpush1.xpose.msra.mxu0 0.0
    %591 = vmatprep.subr.mxu0 0.0
    %592 = vmatpush1.xpose.msra.mxu0 0.0
    %593 = vmatprep.subr.mxu0 0.0
    %594 = vmatpush1.xpose.msra.mxu0 0.0
    %595 = vmatprep.subr.mxu0 0.0
    %596 = vmatpush1.xpose.msra.mxu0 0.0
    %597 = vmatprep.subr.mxu0 0.0
    %598 = vmatpush1.xpose.msra.mxu0 0.0
    %599 = vmatprep.subr.mxu0 0.0
    %600 = vmatpush1.xpose.msra.mxu0 0.0
    %601 = vmatprep.subr.mxu0 0.0
    %602 = vmatpush1.xpose.msra.mxu0 0.0
    %603 = vmatprep.subr.mxu0 0.0
    %604 = vmatpush1.xpose.msra.mxu0 0.0
    %605 = vmatprep.subr.mxu0 0.0
    %606 = vmatpush1.xpose.msra.mxu0 0.0
    %607 = vmatprep.subr.mxu0 0.0
    %608 = vmatpush1.xpose.msra.mxu0 0.0
    %609 = vmatprep.subr.mxu0 0.0
    %610 = vmatpush1.xpose.msra.mxu0 0.0
    %611 = vmatprep.subr.mxu0 0.0
    %612 = vmatpush1.xpose.msra.mxu0 0.0
    %613 = vmatprep.subr.mxu0 0.0
    %614 = vmatpush1.xpose.msra.mxu0 0.0
    %615 = vmatprep.subr.mxu0 0.0
    %616 = vmatpush1.xpose.msra.mxu0 0.0
    %617 = vmatprep.subr.mxu0 0.0
    %618 = vmatpush1.xpose.msra.mxu0 0.0
    %619 = vmatprep.subr.mxu0 0.0
    %620 = vmatpush1.xpose.msra.mxu0 0.0
    %621 = vmatprep.subr.mxu0 0.0
    %622 = vmatpush1.xpose.msra.mxu0 0.0
    %623 = vmatprep.subr.mxu0 0.0
    %624 = vmatpush1.xpose.msra.mxu0 0.0
    %625 = vmatprep.mubr.f32.mxu0 0.0
    %v626 = vand.u32 %v238, 4294901760
    %627 = vmatmul.mubr.f32.gmra.mrb[0].mxu0 %v626
    %v628 = vpop.f32.mrb[0].mxu0
    %v629 = vadd.f32 %v552, %v628
    %v630 = vpop.f32.mrb[0].mxu0
    %631 = vdwg.mxu0
    %632 = vmatprep.subr.mxu0 0.0
    %v633 = vand.u32 %v241, 4294901760
    %634 = vmatpush1.xpose.msra.mxu0 %v633
    %635 = vmatprep.subr.mxu0 0.0
    %v636 = vand.u32 %v244, 4294901760
    %637 = vmatpush1.xpose.msra.mxu0 %v636
    %638 = vmatprep.subr.mxu0 0.0
    %639 = vmatpush1.xpose.msra.mxu0 0.0
    %640 = vmatprep.subr.mxu0 0.0
    %641 = vmatpush1.xpose.msra.mxu0 0.0
    %642 = vmatprep.subr.mxu0 0.0
    %643 = vmatpush1.xpose.msra.mxu0 0.0
    %644 = vmatprep.subr.mxu0 0.0
    %645 = vmatpush1.xpose.msra.mxu0 0.0
    %646 = vmatprep.subr.mxu0 0.0
    %647 = vmatpush1.xpose.msra.mxu0 0.0
    %648 = vmatprep.subr.mxu0 0.0
    %649 = vmatpush1.xpose.msra.mxu0 0.0
    %650 = vmatprep.subr.mxu0 0.0
    %651 = vmatpush1.xpose.msra.mxu0 0.0
    %652 = vmatprep.subr.mxu0 0.0
    %653 = vmatpush1.xpose.msra.mxu0 0.0
    %654 = vmatprep.subr.mxu0 0.0
    %655 = vmatpush1.xpose.msra.mxu0 0.0
    %656 = vmatprep.subr.mxu0 0.0
    %657 = vmatpush1.xpose.msra.mxu0 0.0
    %658 = vmatprep.subr.mxu0 0.0
    %659 = vmatpush1.xpose.msra.mxu0 0.0
    %660 = vmatprep.subr.mxu0 0.0
    %661 = vmatpush1.xpose.msra.mxu0 0.0
    %662 = vmatprep.subr.mxu0 0.0
    %663 = vmatpush1.xpose.msra.mxu0 0.0
    %664 = vmatprep.subr.mxu0 0.0
    %665 = vmatpush1.xpose.msra.mxu0 0.0
    %666 = vmatprep.subr.mxu0 0.0
    %667 = vmatpush1.xpose.msra.mxu0 0.0
    %668 = vmatprep.subr.mxu0 0.0
    %669 = vmatpush1.xpose.msra.mxu0 0.0
    %670 = vmatprep.subr.mxu0 0.0
    %671 = vmatpush1.xpose.msra.mxu0 0.0
    %672 = vmatprep.subr.mxu0 0.0
    %673 = vmatpush1.xpose.msra.mxu0 0.0
    %674 = vmatprep.subr.mxu0 0.0
    %675 = vmatpush1.xpose.msra.mxu0 0.0
    %676 = vmatprep.subr.mxu0 0.0
    %677 = vmatpush1.xpose.msra.mxu0 0.0
    %678 = vmatprep.subr.mxu0 0.0
    %679 = vmatpush1.xpose.msra.mxu0 0.0
    %680 = vmatprep.subr.mxu0 0.0
    %681 = vmatpush1.xpose.msra.mxu0 0.0
    %682 = vmatprep.subr.mxu0 0.0
    %683 = vmatpush1.xpose.msra.mxu0 0.0
    %684 = vmatprep.subr.mxu0 0.0
    %685 = vmatpush1.xpose.msra.mxu0 0.0
    %686 = vmatprep.subr.mxu0 0.0
    %687 = vmatpush1.xpose.msra.mxu0 0.0
    %688 = vmatprep.subr.mxu0 0.0
    %689 = vmatpush1.xpose.msra.mxu0 0.0
    %690 = vmatprep.subr.mxu0 0.0
    %691 = vmatpush1.xpose.msra.mxu0 0.0
    %692 = vmatprep.subr.mxu0 0.0
    %693 = vmatpush1.xpose.msra.mxu0 0.0
    %694 = vmatprep.subr.mxu0 0.0
    %695 = vmatpush1.xpose.msra.mxu0 0.0
    %696 = vmatprep.subr.mxu0 0.0
    %697 = vmatpush1.xpose.msra.mxu0 0.0
    %698 = vmatprep.mubr.f32.mxu0 0.0
    %v699 = vand.u32 %v238, 4294901760
    %700 = vmatmul.mubr.f32.gmra.mrb[0].mxu0 %v699
    %v701 = vpop.f32.mrb[0].mxu0
    %v702 = vadd.f32 %v629, %v701
    %v703 = vpop.f32.mrb[0].mxu0
    %704 = vdwg.mxu0
    %v706 = vsel %vm236, %v113, 0
    %v709 = vsel %vm236, %v234, 0
    %v712 = vsel %vm236, %v235, 0
    %714 = vmatprep.subr.mxu0 0.0
    %v715 = vand.u32 %v709, 4294901760
    %716 = vmatpush1.xpose.msra.mxu0 %v715
    %717 = vmatprep.subr.mxu0 0.0
    %v718 = vand.u32 %v712, 4294901760
    %719 = vmatpush1.xpose.msra.mxu0 %v718
    %720 = vmatprep.subr.mxu0 0.0
    %721 = vmatpush1.xpose.msra.mxu0 0.0
    %722 = vmatprep.subr.mxu0 0.0
    %723 = vmatpush1.xpose.msra.mxu0 0.0
    %724 = vmatprep.subr.mxu0 0.0
    %725 = vmatpush1.xpose.msra.mxu0 0.0
    %726 = vmatprep.subr.mxu0 0.0
    %727 = vmatpush1.xpose.msra.mxu0 0.0
    %728 = vmatprep.subr.mxu0 0.0
    %729 = vmatpush1.xpose.msra.mxu0 0.0
    %730 = vmatprep.subr.mxu0 0.0
    %731 = vmatpush1.xpose.msra.mxu0 0.0
    %732 = vmatprep.subr.mxu0 0.0
    %733 = vmatpush1.xpose.msra.mxu0 0.0
    %734 = vmatprep.subr.mxu0 0.0
    %735 = vmatpush1.xpose.msra.mxu0 0.0
    %736 = vmatprep.subr.mxu0 0.0
    %737 = vmatpush1.xpose.msra.mxu0 0.0
    %738 = vmatprep.subr.mxu0 0.0
    %739 = vmatpush1.xpose.msra.mxu0 0.0
    %740 = vmatprep.subr.mxu0 0.0
    %741 = vmatpush1.xpose.msra.mxu0 0.0
    %742 = vmatprep.subr.mxu0 0.0
    %743 = vmatpush1.xpose.msra.mxu0 0.0
    %744 = vmatprep.subr.mxu0 0.0
    %745 = vmatpush1.xpose.msra.mxu0 0.0
    %746 = vmatprep.subr.mxu0 0.0
    %747 = vmatpush1.xpose.msra.mxu0 0.0
    %748 = vmatprep.subr.mxu0 0.0
    %749 = vmatpush1.xpose.msra.mxu0 0.0
    %750 = vmatprep.subr.mxu0 0.0
    %751 = vmatpush1.xpose.msra.mxu0 0.0
    %752 = vmatprep.subr.mxu0 0.0
    %753 = vmatpush1.xpose.msra.mxu0 0.0
    %754 = vmatprep.subr.mxu0 0.0
    %755 = vmatpush1.xpose.msra.mxu0 0.0
    %756 = vmatprep.subr.mxu0 0.0
    %757 = vmatpush1.xpose.msra.mxu0 0.0
    %758 = vmatprep.subr.mxu0 0.0
    %759 = vmatpush1.xpose.msra.mxu0 0.0
    %760 = vmatprep.subr.mxu0 0.0
    %761 = vmatpush1.xpose.msra.mxu0 0.0
    %762 = vmatprep.subr.mxu0 0.0
    %763 = vmatpush1.xpose.msra.mxu0 0.0
    %764 = vmatprep.subr.mxu0 0.0
    %765 = vmatpush1.xpose.msra.mxu0 0.0
    %766 = vmatprep.subr.mxu0 0.0
    %767 = vmatpush1.xpose.msra.mxu0 0.0
    %768 = vmatprep.subr.mxu0 0.0
    %769 = vmatpush1.xpose.msra.mxu0 0.0
    %770 = vmatprep.subr.mxu0 0.0
    %771 = vmatpush1.xpose.msra.mxu0 0.0
    %772 = vmatprep.subr.mxu0 0.0
    %773 = vmatpush1.xpose.msra.mxu0 0.0
    %774 = vmatprep.subr.mxu0 0.0
    %775 = vmatpush1.xpose.msra.mxu0 0.0
    %776 = vmatprep.subr.mxu0 0.0
    %777 = vmatpush1.xpose.msra.mxu0 0.0
    %778 = vmatprep.subr.mxu0 0.0
    %779 = vmatpush1.xpose.msra.mxu0 0.0
    %780 = vmatprep.mubr.f32.mxu0 0.0
    %v781 = vand.u32 %v706, 4294901760
    %v782 = vsub.f32 %v706, %v781
    %v783 = vand.u32 %v782, 4294901760
    %v784 = vsub.f32 %v782, %v783
    %v785 = vand.u32 %v784, 4294901760
    %786 = vmatmul.mubr.f32.gmra.mrb[0].mxu0 %v785
    %v787 = vpop.f32.mrb[0].mxu0
    %v788 = vadd.f32 0.0, %v787
    %v789 = vpop.f32.mrb[0].mxu0
    %790 = vdwg.mxu0
    %791 = vmatprep.subr.mxu0 0.0
    %v792 = vand.u32 %v709, 4294901760
    %v793 = vsub.f32 %v709, %v792
    %v794 = vand.u32 %v793, 4294901760
    %v795 = vsub.f32 %v793, %v794
    %v796 = vand.u32 %v795, 4294901760
    %797 = vmatpush1.xpose.msra.mxu0 %v796
    %798 = vmatprep.subr.mxu0 0.0
    %v799 = vand.u32 %v712, 4294901760
    %v800 = vsub.f32 %v712, %v799
    %v801 = vand.u32 %v800, 4294901760
    %v802 = vsub.f32 %v800, %v801
    %v803 = vand.u32 %v802, 4294901760
    %804 = vmatpush1.xpose.msra.mxu0 %v803
    %805 = vmatprep.subr.mxu0 0.0
    %806 = vmatpush1.xpose.msra.mxu0 0.0
    %807 = vmatprep.subr.mxu0 0.0
    %808 = vmatpush1.xpose.msra.mxu0 0.0
    %809 = vmatprep.subr.mxu0 0.0
    %810 = vmatpush1.xpose.msra.mxu0 0.0
    %811 = vmatprep.subr.mxu0 0.0
    %812 = vmatpush1.xpose.msra.mxu0 0.0
    %813 = vmatprep.subr.mxu0 0.0
    %814 = vmatpush1.xpose.msra.mxu0 0.0
    %815 = vmatprep.subr.mxu0 0.0
    %816 = vmatpush1.xpose.msra.mxu0 0.0
    %817 = vmatprep.subr.mxu0 0.0
    %818 = vmatpush1.xpose.msra.mxu0 0.0
    %819 = vmatprep.subr.mxu0 0.0
    %820 = vmatpush1.xpose.msra.mxu0 0.0
    %821 = vmatprep.subr.mxu0 0.0
    %822 = vmatpush1.xpose.msra.mxu0 0.0
    %823 = vmatprep.subr.mxu0 0.0
    %824 = vmatpush1.xpose.msra.mxu0 0.0
    %825 = vmatprep.subr.mxu0 0.0
    %826 = vmatpush1.xpose.msra.mxu0 0.0
    %827 = vmatprep.subr.mxu0 0.0
    %828 = vmatpush1.xpose.msra.mxu0 0.0
    %829 = vmatprep.subr.mxu0 0.0
    %830 = vmatpush1.xpose.msra.mxu0 0.0
    %831 = vmatprep.subr.mxu0 0.0
    %832 = vmatpush1.xpose.msra.mxu0 0.0
    %833 = vmatprep.subr.mxu0 0.0
    %834 = vmatpush1.xpose.msra.mxu0 0.0
    %835 = vmatprep.subr.mxu0 0.0
    %836 = vmatpush1.xpose.msra.mxu0 0.0
    %837 = vmatprep.subr.mxu0 0.0
    %838 = vmatpush1.xpose.msra.mxu0 0.0
    %839 = vmatprep.subr.mxu0 0.0
    %840 = vmatpush1.xpose.msra.mxu0 0.0
    %841 = vmatprep.subr.mxu0 0.0
    %842 = vmatpush1.xpose.msra.mxu0 0.0
    %843 = vmatprep.subr.mxu0 0.0
    %844 = vmatpush1.xpose.msra.mxu0 0.0
    %845 = vmatprep.subr.mxu0 0.0
    %846 = vmatpush1.xpose.msra.mxu0 0.0
    %847 = vmatprep.subr.mxu0 0.0
    %848 = vmatpush1.xpose.msra.mxu0 0.0
    %849 = vmatprep.subr.mxu0 0.0
    %850 = vmatpush1.xpose.msra.mxu0 0.0
    %851 = vmatprep.subr.mxu0 0.0
    %852 = vmatpush1.xpose.msra.mxu0 0.0
    %853 = vmatprep.subr.mxu0 0.0
    %854 = vmatpush1.xpose.msra.mxu0 0.0
    %855 = vmatprep.subr.mxu0 0.0
    %856 = vmatpush1.xpose.msra.mxu0 0.0
    %857 = vmatprep.subr.mxu0 0.0
    %858 = vmatpush1.xpose.msra.mxu0 0.0
    %859 = vmatprep.subr.mxu0 0.0
    %860 = vmatpush1.xpose.msra.mxu0 0.0
    %861 = vmatprep.subr.mxu0 0.0
    %862 = vmatpush1.xpose.msra.mxu0 0.0
    %863 = vmatprep.subr.mxu0 0.0
    %864 = vmatpush1.xpose.msra.mxu0 0.0
    %865 = vmatprep.mubr.f32.mxu0 0.0
    %v866 = vand.u32 %v706, 4294901760
    %867 = vmatmul.mubr.f32.gmra.mrb[0].mxu0 %v866
    %v868 = vpop.f32.mrb[0].mxu0
    %v869 = vadd.f32 %v788, %v868
    %v870 = vpop.f32.mrb[0].mxu0
    %871 = vdwg.mxu0
    %872 = vmatprep.subr.mxu0 0.0
    %v873 = vand.u32 %v709, 4294901760
    %v874 = vsub.f32 %v709, %v873
    %875 = vmatpush1.xpose.msra.mxu0 %v874
    %876 = vmatprep.subr.mxu0 0.0
    %v877 = vand.u32 %v712, 4294901760
    %v878 = vsub.f32 %v712, %v877
    %879 = vmatpush1.xpose.msra.mxu0 %v878
    %880 = vmatprep.subr.mxu0 0.0
    %881 = vmatpush1.xpose.msra.mxu0 0.0
    %882 = vmatprep.subr.mxu0 0.0
    %883 = vmatpush1.xpose.msra.mxu0 0.0
    %884 = vmatprep.subr.mxu0 0.0
    %885 = vmatpush1.xpose.msra.mxu0 0.0
    %886 = vmatprep.subr.mxu0 0.0
    %887 = vmatpush1.xpose.msra.mxu0 0.0
    %888 = vmatprep.subr.mxu0 0.0
    %889 = vmatpush1.xpose.msra.mxu0 0.0
    %890 = vmatprep.subr.mxu0 0.0
    %891 = vmatpush1.xpose.msra.mxu0 0.0
    %892 = vmatprep.subr.mxu0 0.0
    %893 = vmatpush1.xpose.msra.mxu0 0.0
    %894 = vmatprep.subr.mxu0 0.0
    %895 = vmatpush1.xpose.msra.mxu0 0.0
    %896 = vmatprep.subr.mxu0 0.0
    %897 = vmatpush1.xpose.msra.mxu0 0.0
    %898 = vmatprep.subr.mxu0 0.0
    %899 = vmatpush1.xpose.msra.mxu0 0.0
    %900 = vmatprep.subr.mxu0 0.0
    %901 = vmatpush1.xpose.msra.mxu0 0.0
    %902 = vmatprep.subr.mxu0 0.0
    %903 = vmatpush1.xpose.msra.mxu0 0.0
    %904 = vmatprep.subr.mxu0 0.0
    %905 = vmatpush1.xpose.msra.mxu0 0.0
    %906 = vmatprep.subr.mxu0 0.0
    %907 = vmatpush1.xpose.msra.mxu0 0.0
    %908 = vmatprep.subr.mxu0 0.0
    %909 = vmatpush1.xpose.msra.mxu0 0.0
    %910 = vmatprep.subr.mxu0 0.0
    %911 = vmatpush1.xpose.msra.mxu0 0.0
    %912 = vmatprep.subr.mxu0 0.0
    %913 = vmatpush1.xpose.msra.mxu0 0.0
    %914 = vmatprep.subr.mxu0 0.0
    %915 = vmatpush1.xpose.msra.mxu0 0.0
    %916 = vmatprep.subr.mxu0 0.0
    %917 = vmatpush1.xpose.msra.mxu0 0.0
    %918 = vmatprep.subr.mxu0 0.0
    %919 = vmatpush1.xpose.msra.mxu0 0.0
    %920 = vmatprep.subr.mxu0 0.0
    %921 = vmatpush1.xpose.msra.mxu0 0.0
    %922 = vmatprep.subr.mxu0 0.0
    %923 = vmatpush1.xpose.msra.mxu0 0.0
    %924 = vmatprep.subr.mxu0 0.0
    %925 = vmatpush1.xpose.msra.mxu0 0.0
    %926 = vmatprep.subr.mxu0 0.0
    %927 = vmatpush1.xpose.msra.mxu0 0.0
    %928 = vmatprep.subr.mxu0 0.0
    %929 = vmatpush1.xpose.msra.mxu0 0.0
    %930 = vmatprep.subr.mxu0 0.0
    %931 = vmatpush1.xpose.msra.mxu0 0.0
    %932 = vmatprep.subr.mxu0 0.0
    %933 = vmatpush1.xpose.msra.mxu0 0.0
    %934 = vmatprep.subr.mxu0 0.0
    %935 = vmatpush1.xpose.msra.mxu0 0.0
    %936 = vmatprep.subr.mxu0 0.0
    %937 = vmatpush1.xpose.msra.mxu0 0.0
    %938 = vmatprep.subr.mxu0 0.0
    %939 = vmatpush1.xpose.msra.mxu0 0.0
    %940 = vmatprep.mubr.f32.mxu0 0.0
    %v941 = vand.u32 %v706, 4294901760
    %v942 = vsub.f32 %v706, %v941
    %943 = vmatmul.mubr.f32.gmra.mrb[0].mxu0 %v942
    %v944 = vpop.f32.mrb[0].mxu0
    %v945 = vadd.f32 %v869, %v944
    %v946 = vpop.f32.mrb[0].mxu0
    %947 = vdwg.mxu0
    %948 = vmatprep.subr.mxu0 0.0
    %v949 = vand.u32 %v709, 4294901760
    %950 = vmatpush1.xpose.msra.mxu0 %v949
    %951 = vmatprep.subr.mxu0 0.0
    %v952 = vand.u32 %v712, 4294901760
    %953 = vmatpush1.xpose.msra.mxu0 %v952
    %954 = vmatprep.subr.mxu0 0.0
    %955 = vmatpush1.xpose.msra.mxu0 0.0
    %956 = vmatprep.subr.mxu0 0.0
    %957 = vmatpush1.xpose.msra.mxu0 0.0
    %958 = vmatprep.subr.mxu0 0.0
    %959 = vmatpush1.xpose.msra.mxu0 0.0
    %960 = vmatprep.subr.mxu0 0.0
    %961 = vmatpush1.xpose.msra.mxu0 0.0
    %962 = vmatprep.subr.mxu0 0.0
    %963 = vmatpush1.xpose.msra.mxu0 0.0
    %964 = vmatprep.subr.mxu0 0.0
    %965 = vmatpush1.xpose.msra.mxu0 0.0
    %966 = vmatprep.subr.mxu0 0.0
    %967 = vmatpush1.xpose.msra.mxu0 0.0
    %968 = vmatprep.subr.mxu0 0.0
    %969 = vmatpush1.xpose.msra.mxu0 0.0
    %970 = vmatprep.subr.mxu0 0.0
    %971 = vmatpush1.xpose.msra.mxu0 0.0
    %972 = vmatprep.subr.mxu0 0.0
    %973 = vmatpush1.xpose.msra.mxu0 0.0
    %974 = vmatprep.subr.mxu0 0.0
    %975 = vmatpush1.xpose.msra.mxu0 0.0
    %976 = vmatprep.subr.mxu0 0.0
    %977 = vmatpush1.xpose.msra.mxu0 0.0
    %978 = vmatprep.subr.mxu0 0.0
    %979 = vmatpush1.xpose.msra.mxu0 0.0
    %980 = vmatprep.subr.mxu0 0.0
    %981 = vmatpush1.xpose.msra.mxu0 0.0
    %982 = vmatprep.subr.mxu0 0.0
    %983 = vmatpush1.xpose.msra.mxu0 0.0
    %984 = vmatprep.subr.mxu0 0.0
    %985 = vmatpush1.xpose.msra.mxu0 0.0
    %986 = vmatprep.subr.mxu0 0.0
    %987 = vmatpush1.xpose.msra.mxu0 0.0
    %988 = vmatprep.subr.mxu0 0.0
    %989 = vmatpush1.xpose.msra.mxu0 0.0
    %990 = vmatprep.subr.mxu0 0.0
    %991 = vmatpush1.xpose.msra.mxu0 0.0
    %992 = vmatprep.subr.mxu0 0.0
    %993 = vmatpush1.xpose.msra.mxu0 0.0
    %994 = vmatprep.subr.mxu0 0.0
    %995 = vmatpush1.xpose.msra.mxu0 0.0
    %996 = vmatprep.subr.mxu0 0.0
    %997 = vmatpush1.xpose.msra.mxu0 0.0
    %998 = vmatprep.subr.mxu0 0.0
    %999 = vmatpush1.xpose.msra.mxu0 0.0
    %1000 = vmatprep.subr.mxu0 0.0
    %1001 = vmatpush1.xpose.msra.mxu0 0.0
    %1002 = vmatprep.subr.mxu0 0.0
    %1003 = vmatpush1.xpose.msra.mxu0 0.0
    %1004 = vmatprep.subr.mxu0 0.0
    %1005 = vmatpush1.xpose.msra.mxu0 0.0
    %1006 = vmatprep.subr.mxu0 0.0
    %1007 = vmatpush1.xpose.msra.mxu0 0.0
    %1008 = vmatprep.subr.mxu0 0.0
    %1009 = vmatpush1.xpose.msra.mxu0 0.0
    %1010 = vmatprep.subr.mxu0 0.0
    %1011 = vmatpush1.xpose.msra.mxu0 0.0
    %1012 = vmatprep.subr.mxu0 0.0
    %1013 = vmatpush1.xpose.msra.mxu0 0.0
    %1014 = vmatprep.mubr.f32.mxu0 0.0
    %v1015 = vand.u32 %v706, 4294901760
    %v1016 = vsub.f32 %v706, %v1015
    %v1017 = vand.u32 %v1016, 4294901760
    %1018 = vmatmul.mubr.f32.gmra.mrb[0].mxu0 %v1017
    %v1019 = vpop.f32.mrb[0].mxu0
    %v1020 = vadd.f32 %v945, %v1019
    %v1021 = vpop.f32.mrb[0].mxu0
    %1022 = vdwg.mxu0
    %1023 = vmatprep.subr.mxu0 0.0
    %v1024 = vand.u32 %v709, 4294901760
    %v1025 = vsub.f32 %v709, %v1024
    %v1026 = vand.u32 %v1025, 4294901760
    %1027 = vmatpush1.xpose.msra.mxu0 %v1026
    %1028 = vmatprep.subr.mxu0 0.0
    %v1029 = vand.u32 %v712, 4294901760
    %v1030 = vsub.f32 %v712, %v1029
    %v1031 = vand.u32 %v1030, 4294901760
    %1032 = vmatpush1.xpose.msra.mxu0 %v1031
    %1033 = vmatprep.subr.mxu0 0.0
    %1034 = vmatpush1.xpose.msra.mxu0 0.0
    %1035 = vmatprep.subr.mxu0 0.0
    %1036 = vmatpush1.xpose.msra.mxu0 0.0
    %1037 = vmatprep.subr.mxu0 0.0
    %1038 = vmatpush1.xpose.msra.mxu0 0.0
    %1039 = vmatprep.subr.mxu0 0.0
    %1040 = vmatpush1.xpose.msra.mxu0 0.0
    %1041 = vmatprep.subr.mxu0 0.0
    %1042 = vmatpush1.xpose.msra.mxu0 0.0
    %1043 = vmatprep.subr.mxu0 0.0
    %1044 = vmatpush1.xpose.msra.mxu0 0.0
    %1045 = vmatprep.subr.mxu0 0.0
    %1046 = vmatpush1.xpose.msra.mxu0 0.0
    %1047 = vmatprep.subr.mxu0 0.0
    %1048 = vmatpush1.xpose.msra.mxu0 0.0
    %1049 = vmatprep.subr.mxu0 0.0
    %1050 = vmatpush1.xpose.msra.mxu0 0.0
    %1051 = vmatprep.subr.mxu0 0.0
    %1052 = vmatpush1.xpose.msra.mxu0 0.0
    %1053 = vmatprep.subr.mxu0 0.0
    %1054 = vmatpush1.xpose.msra.mxu0 0.0
    %1055 = vmatprep.subr.mxu0 0.0
    %1056 = vmatpush1.xpose.msra.mxu0 0.0
    %1057 = vmatprep.subr.mxu0 0.0
    %1058 = vmatpush1.xpose.msra.mxu0 0.0
    %1059 = vmatprep.subr.mxu0 0.0
    %1060 = vmatpush1.xpose.msra.mxu0 0.0
    %1061 = vmatprep.subr.mxu0 0.0
    %1062 = vmatpush1.xpose.msra.mxu0 0.0
    %1063 = vmatprep.subr.mxu0 0.0
    %1064 = vmatpush1.xpose.msra.mxu0 0.0
    %1065 = vmatprep.subr.mxu0 0.0
    %1066 = vmatpush1.xpose.msra.mxu0 0.0
    %1067 = vmatprep.subr.mxu0 0.0
    %1068 = vmatpush1.xpose.msra.mxu0 0.0
    %1069 = vmatprep.subr.mxu0 0.0
    %1070 = vmatpush1.xpose.msra.mxu0 0.0
    %1071 = vmatprep.subr.mxu0 0.0
    %1072 = vmatpush1.xpose.msra.mxu0 0.0
    %1073 = vmatprep.subr.mxu0 0.0
    %1074 = vmatpush1.xpose.msra.mxu0 0.0
    %1075 = vmatprep.subr.mxu0 0.0
    %1076 = vmatpush1.xpose.msra.mxu0 0.0
    %1077 = vmatprep.subr.mxu0 0.0
    %1078 = vmatpush1.xpose.msra.mxu0 0.0
    %1079 = vmatprep.subr.mxu0 0.0
    %1080 = vmatpush1.xpose.msra.mxu0 0.0
    %1081 = vmatprep.subr.mxu0 0.0
    %1082 = vmatpush1.xpose.msra.mxu0 0.0
    %1083 = vmatprep.subr.mxu0 0.0
    %1084 = vmatpush1.xpose.msra.mxu0 0.0
    %1085 = vmatprep.subr.mxu0 0.0
    %1086 = vmatpush1.xpose.msra.mxu0 0.0
    %1087 = vmatprep.subr.mxu0 0.0
    %1088 = vmatpush1.xpose.msra.mxu0 0.0
    %1089 = vmatprep.subr.mxu0 0.0
    %1090 = vmatpush1.xpose.msra.mxu0 0.0
    %1091 = vmatprep.subr.mxu0 0.0
    %1092 = vmatpush1.xpose.msra.mxu0 0.0
    %1093 = vmatprep.mubr.f32.mxu0 0.0
    %v1094 = vand.u32 %v706, 4294901760
    %1095 = vmatmul.mubr.f32.gmra.mrb[0].mxu0 %v1094
    %v1096 = vpop.f32.mrb[0].mxu0
    %v1097 = vadd.f32 %v1020, %v1096
    %v1098 = vpop.f32.mrb[0].mxu0
    %1099 = vdwg.mxu0
    %1100 = vmatprep.subr.mxu0 0.0
    %v1101 = vand.u32 %v709, 4294901760
    %1102 = vmatpush1.xpose.msra.mxu0 %v1101
    %1103 = vmatprep.subr.mxu0 0.0
    %v1104 = vand.u32 %v712, 4294901760
    %1105 = vmatpush1.xpose.msra.mxu0 %v1104
    %1106 = vmatprep.subr.mxu0 0.0
    %1107 = vmatpush1.xpose.msra.mxu0 0.0
    %1108 = vmatprep.subr.mxu0 0.0
    %1109 = vmatpush1.xpose.msra.mxu0 0.0
    %1110 = vmatprep.subr.mxu0 0.0
    %1111 = vmatpush1.xpose.msra.mxu0 0.0
    %1112 = vmatprep.subr.mxu0 0.0
    %1113 = vmatpush1.xpose.msra.mxu0 0.0
    %1114 = vmatprep.subr.mxu0 0.0
    %1115 = vmatpush1.xpose.msra.mxu0 0.0
    %1116 = vmatprep.subr.mxu0 0.0
    %1117 = vmatpush1.xpose.msra.mxu0 0.0
    %1118 = vmatprep.subr.mxu0 0.0
    %1119 = vmatpush1.xpose.msra.mxu0 0.0
    %1120 = vmatprep.subr.mxu0 0.0
    %1121 = vmatpush1.xpose.msra.mxu0 0.0
    %1122 = vmatprep.subr.mxu0 0.0
    %1123 = vmatpush1.xpose.msra.mxu0 0.0
    %1124 = vmatprep.subr.mxu0 0.0
    %1125 = vmatpush1.xpose.msra.mxu0 0.0
    %1126 = vmatprep.subr.mxu0 0.0
    %1127 = vmatpush1.xpose.msra.mxu0 0.0
    %1128 = vmatprep.subr.mxu0 0.0
    %1129 = vmatpush1.xpose.msra.mxu0 0.0
    %1130 = vmatprep.subr.mxu0 0.0
    %1131 = vmatpush1.xpose.msra.mxu0 0.0
    %1132 = vmatprep.subr.mxu0 0.0
    %1133 = vmatpush1.xpose.msra.mxu0 0.0
    %1134 = vmatprep.subr.mxu0 0.0
    %1135 = vmatpush1.xpose.msra.mxu0 0.0
    %1136 = vmatprep.subr.mxu0 0.0
    %1137 = vmatpush1.xpose.msra.mxu0 0.0
    %1138 = vmatprep.subr.mxu0 0.0
    %1139 = vmatpush1.xpose.msra.mxu0 0.0
    %1140 = vmatprep.subr.mxu0 0.0
    %1141 = vmatpush1.xpose.msra.mxu0 0.0
    %1142 = vmatprep.subr.mxu0 0.0
    %1143 = vmatpush1.xpose.msra.mxu0 0.0
    %1144 = vmatprep.subr.mxu0 0.0
    %1145 = vmatpush1.xpose.msra.mxu0 0.0
    %1146 = vmatprep.subr.mxu0 0.0
    %1147 = vmatpush1.xpose.msra.mxu0 0.0
    %1148 = vmatprep.subr.mxu0 0.0
    %1149 = vmatpush1.xpose.msra.mxu0 0.0
    %1150 = vmatprep.subr.mxu0 0.0
    %1151 = vmatpush1.xpose.msra.mxu0 0.0
    %1152 = vmatprep.subr.mxu0 0.0
    %1153 = vmatpush1.xpose.msra.mxu0 0.0
    %1154 = vmatprep.subr.mxu0 0.0
    %1155 = vmatpush1.xpose.msra.mxu0 0.0
    %1156 = vmatprep.subr.mxu0 0.0
    %1157 = vmatpush1.xpose.msra.mxu0 0.0
    %1158 = vmatprep.subr.mxu0 0.0
    %1159 = vmatpush1.xpose.msra.mxu0 0.0
    %1160 = vmatprep.subr.mxu0 0.0
    %1161 = vmatpush1.xpose.msra.mxu0 0.0
    %1162 = vmatprep.subr.mxu0 0.0
    %1163 = vmatpush1.xpose.msra.mxu0 0.0
    %1164 = vmatprep.subr.mxu0 0.0
    %1165 = vmatpush1.xpose.msra.mxu0 0.0
    %1166 = vmatprep.mubr.f32.mxu0 0.0
    %v1167 = vand.u32 %v706, 4294901760
    %1168 = vmatmul.mubr.f32.gmra.mrb[0].mxu0 %v1167
    %v1169 = vpop.f32.mrb[0].mxu0
    %v1170 = vadd.f32 %v1097, %v1169
    %v1171 = vpop.f32.mrb[0].mxu0
    %1172 = vdwg.mxu0
    %v1173 = vmul.f32 %v702, 14.285714
    %v1174 = vmul.f32 %v1170, 14.285714
    %vm1175 = vcmask 130048
    %v1176 = vsel %vm1175, %v1173, -inf
    %1177 = vmax.xlane.f32.xlu0 %v1176
    %v1178 = vpop.xlane.xlu0 %1177
    %v1179 = vsel %vm1175, %v1174, -inf
    %1180 = vmax.xlane.f32.xlu0 %v1179
    %v1181 = vpop.xlane.xlu0 %1180
    %v1182 = vsub.f32 %v1173, %v1178
    %v1183 = vsub.f32 %v1174, %v1181
    %v1184 = vmul.f32 %v1182, 1.442695
    %v1185 = vpow.pop %v1184
    %v1186 = vmul.f32 %v1183, 1.442695
    %v1187 = vpow.pop %v1186
    %v1188 = vsel %vm1175, %v1185, 0.0
    %1189 = vadd.xlane.f32.xlu0 %v1188
    %v1190 = vpop.xlane.xlu0 %1189
    %v1191 = vsel %vm1175, %v1187, 0.0
    %1192 = vadd.xlane.f32.xlu0 %v1191
    %v1193 = vpop.xlane.xlu0 %1192
    %v1194 = vrcp.pop %v1190
    %v1195 = vmul.f32 %v1185, %v1194
    %v1196 = vrcp.pop %v1193
    %v1197 = vmul.f32 %v1187, %v1196
    %v1199 = vsel %vm1175, %v1195, 0
    %1201 = vmatprep.subr.mxu0 0.0
    %v1202 = vand.u32 %v178, 4294901760
    %1203 = vmatpush1.msra.mxu0 %v1202
    %1204 = vmatprep.subr.mxu0 0.0
    %v1205 = vand.u32 %v228, 4294901760
    %1206 = vmatpush1.msra.mxu0 %v1205
    %1207 = vmatprep.subr.mxu0 0.0
    %1208 = vmatpush1.msra.mxu0 0.0
    %1209 = vmatprep.subr.mxu0 0.0
    %1210 = vmatpush1.msra.mxu0 0.0
    %1211 = vmatprep.subr.mxu0 0.0
    %1212 = vmatpush1.msra.mxu0 0.0
    %1213 = vmatprep.subr.mxu0 0.0
    %1214 = vmatpush1.msra.mxu0 0.0
    %1215 = vmatprep.subr.mxu0 0.0
    %1216 = vmatpush1.msra.mxu0 0.0
    %1217 = vmatprep.subr.mxu0 0.0
    %1218 = vmatpush1.msra.mxu0 0.0
    %1219 = vmatprep.subr.mxu0 0.0
    %1220 = vmatpush1.msra.mxu0 0.0
    %1221 = vmatprep.subr.mxu0 0.0
    %1222 = vmatpush1.msra.mxu0 0.0
    %1223 = vmatprep.subr.mxu0 0.0
    %1224 = vmatpush1.msra.mxu0 0.0
    %1225 = vmatprep.subr.mxu0 0.0
    %1226 = vmatpush1.msra.mxu0 0.0
    %1227 = vmatprep.subr.mxu0 0.0
    %1228 = vmatpush1.msra.mxu0 0.0
    %1229 = vmatprep.subr.mxu0 0.0
    %1230 = vmatpush1.msra.mxu0 0.0
    %1231 = vmatprep.subr.mxu0 0.0
    %1232 = vmatpush1.msra.mxu0 0.0
    %1233 = vmatprep.subr.mxu0 0.0
    %1234 = vmatpush1.msra.mxu0 0.0
    %1235 = vmatprep.subr.mxu0 0.0
    %1236 = vmatpush1.msra.mxu0 0.0
    %1237 = vmatprep.subr.mxu0 0.0
    %1238 = vmatpush1.msra.mxu0 0.0
    %1239 = vmatprep.subr.mxu0 0.0
    %1240 = vmatpush1.msra.mxu0 0.0
    %1241 = vmatprep.subr.mxu0 0.0
    %1242 = vmatpush1.msra.mxu0 0.0
    %1243 = vmatprep.subr.mxu0 0.0
    %1244 = vmatpush1.msra.mxu0 0.0
    %1245 = vmatprep.subr.mxu0 0.0
    %1246 = vmatpush1.msra.mxu0 0.0
    %1247 = vmatprep.subr.mxu0 0.0
    %1248 = vmatpush1.msra.mxu0 0.0
    %1249 = vmatprep.subr.mxu0 0.0
    %1250 = vmatpush1.msra.mxu0 0.0
    %1251 = vmatprep.subr.mxu0 0.0
    %1252 = vmatpush1.msra.mxu0 0.0
    %1253 = vmatprep.subr.mxu0 0.0
    %1254 = vmatpush1.msra.mxu0 0.0
    %1255 = vmatprep.subr.mxu0 0.0
    %1256 = vmatpush1.msra.mxu0 0.0
    %1257 = vmatprep.subr.mxu0 0.0
    %1258 = vmatpush1.msra.mxu0 0.0
    %1259 = vmatprep.subr.mxu0 0.0
    %1260 = vmatpush1.msra.mxu0 0.0
    %1261 = vmatprep.subr.mxu0 0.0
    %1262 = vmatpush1.msra.mxu0 0.0
    %1263 = vmatprep.subr.mxu0 0.0
    %1264 = vmatpush1.msra.mxu0 0.0
    %1265 = vmatprep.subr.mxu0 0.0
    %1266 = vmatpush1.msra.mxu0 0.0
    %1267 = vmatprep.mubr.f32.mxu0 0.0
    %v1268 = vand.u32 %v1199, 4294901760
    %v1269 = vsub.f32 %v1199, %v1268
    %v1270 = vand.u32 %v1269, 4294901760
    %v1271 = vsub.f32 %v1269, %v1270
    %v1272 = vand.u32 %v1271, 4294901760
    %1273 = vmatmul.mubr.f32.gmra.mrb[0].mxu0 %v1272
    %v1274 = vpop.f32.mrb[0].mxu0
    %v1275 = vadd.f32 0.0, %v1274
    %v1276 = vpop.f32.mrb[0].mxu0
    %1277 = vdwg.mxu0
    %1278 = vmatprep.subr.mxu0 0.0
    %v1279 = vand.u32 %v178, 4294901760
    %v1280 = vsub.f32 %v178, %v1279
    %v1281 = vand.u32 %v1280, 4294901760
    %v1282 = vsub.f32 %v1280, %v1281
    %v1283 = vand.u32 %v1282, 4294901760
    %1284 = vmatpush1.msra.mxu0 %v1283
    %1285 = vmatprep.subr.mxu0 0.0
    %v1286 = vand.u32 %v228, 4294901760
    %v1287 = vsub.f32 %v228, %v1286
    %v1288 = vand.u32 %v1287, 4294901760
    %v1289 = vsub.f32 %v1287, %v1288
    %v1290 = vand.u32 %v1289, 4294901760
    %1291 = vmatpush1.msra.mxu0 %v1290
    %1292 = vmatprep.subr.mxu0 0.0
    %1293 = vmatpush1.msra.mxu0 0.0
    %1294 = vmatprep.subr.mxu0 0.0
    %1295 = vmatpush1.msra.mxu0 0.0
    %1296 = vmatprep.subr.mxu0 0.0
    %1297 = vmatpush1.msra.mxu0 0.0
    %1298 = vmatprep.subr.mxu0 0.0
    %1299 = vmatpush1.msra.mxu0 0.0
    %1300 = vmatprep.subr.mxu0 0.0
    %1301 = vmatpush1.msra.mxu0 0.0
    %1302 = vmatprep.subr.mxu0 0.0
    %1303 = vmatpush1.msra.mxu0 0.0
    %1304 = vmatprep.subr.mxu0 0.0
    %1305 = vmatpush1.msra.mxu0 0.0
    %1306 = vmatprep.subr.mxu0 0.0
    %1307 = vmatpush1.msra.mxu0 0.0
    %1308 = vmatprep.subr.mxu0 0.0
    %1309 = vmatpush1.msra.mxu0 0.0
    %1310 = vmatprep.subr.mxu0 0.0
    %1311 = vmatpush1.msra.mxu0 0.0
    %1312 = vmatprep.subr.mxu0 0.0
    %1313 = vmatpush1.msra.mxu0 0.0
    %1314 = vmatprep.subr.mxu0 0.0
    %1315 = vmatpush1.msra.mxu0 0.0
    %1316 = vmatprep.subr.mxu0 0.0
    %1317 = vmatpush1.msra.mxu0 0.0
    %1318 = vmatprep.subr.mxu0 0.0
    %1319 = vmatpush1.msra.mxu0 0.0
    %1320 = vmatprep.subr.mxu0 0.0
    %1321 = vmatpush1.msra.mxu0 0.0
    %1322 = vmatprep.subr.mxu0 0.0
    %1323 = vmatpush1.msra.mxu0 0.0
    %1324 = vmatprep.subr.mxu0 0.0
    %1325 = vmatpush1.msra.mxu0 0.0
    %1326 = vmatprep.subr.mxu0 0.0
    %1327 = vmatpush1.msra.mxu0 0.0
    %1328 = vmatprep.subr.mxu0 0.0
    %1329 = vmatpush1.msra.mxu0 0.0
    %1330 = vmatprep.subr.mxu0 0.0
    %1331 = vmatpush1.msra.mxu0 0.0
    %1332 = vmatprep.subr.mxu0 0.0
    %1333 = vmatpush1.msra.mxu0 0.0
    %1334 = vmatprep.subr.mxu0 0.0
    %1335 = vmatpush1.msra.mxu0 0.0
    %1336 = vmatprep.subr.mxu0 0.0
    %1337 = vmatpush1.msra.mxu0 0.0
    %1338 = vmatprep.subr.mxu0 0.0
    %1339 = vmatpush1.msra.mxu0 0.0
    %1340 = vmatprep.subr.mxu0 0.0
    %1341 = vmatpush1.msra.mxu0 0.0
    %1342 = vmatprep.subr.mxu0 0.0
    %1343 = vmatpush1.msra.mxu0 0.0
    %1344 = vmatprep.subr.mxu0 0.0
    %1345 = vmatpush1.msra.mxu0 0.0
    %1346 = vmatprep.subr.mxu0 0.0
    %1347 = vmatpush1.msra.mxu0 0.0
    %1348 = vmatprep.subr.mxu0 0.0
    %1349 = vmatpush1.msra.mxu0 0.0
    %1350 = vmatprep.subr.mxu0 0.0
    %1351 = vmatpush1.msra.mxu0 0.0
    %1352 = vmatprep.mubr.f32.mxu0 0.0
    %v1353 = vand.u32 %v1199, 4294901760
    %1354 = vmatmul.mubr.f32.gmra.mrb[0].mxu0 %v1353
    %v1355 = vpop.f32.mrb[0].mxu0
    %v1356 = vadd.f32 %v1275, %v1355
    %v1357 = vpop.f32.mrb[0].mxu0
    %1358 = vdwg.mxu0
    %1359 = vmatprep.subr.mxu0 0.0
    %v1360 = vand.u32 %v178, 4294901760
    %v1361 = vsub.f32 %v178, %v1360
    %1362 = vmatpush1.msra.mxu0 %v1361
    %1363 = vmatprep.subr.mxu0 0.0
    %v1364 = vand.u32 %v228, 4294901760
    %v1365 = vsub.f32 %v228, %v1364
    %1366 = vmatpush1.msra.mxu0 %v1365
    %1367 = vmatprep.subr.mxu0 0.0
    %1368 = vmatpush1.msra.mxu0 0.0
    %1369 = vmatprep.subr.mxu0 0.0
    %1370 = vmatpush1.msra.mxu0 0.0
    %1371 = vmatprep.subr.mxu0 0.0
    %1372 = vmatpush1.msra.mxu0 0.0
    %1373 = vmatprep.subr.mxu0 0.0
    %1374 = vmatpush1.msra.mxu0 0.0
    %1375 = vmatprep.subr.mxu0 0.0
    %1376 = vmatpush1.msra.mxu0 0.0
    %1377 = vmatprep.subr.mxu0 0.0
    %1378 = vmatpush1.msra.mxu0 0.0
    %1379 = vmatprep.subr.mxu0 0.0
    %1380 = vmatpush1.msra.mxu0 0.0
    %1381 = vmatprep.subr.mxu0 0.0
    %1382 = vmatpush1.msra.mxu0 0.0
    %1383 = vmatprep.subr.mxu0 0.0
    %1384 = vmatpush1.msra.mxu0 0.0
    %1385 = vmatprep.subr.mxu0 0.0
    %1386 = vmatpush1.msra.mxu0 0.0
    %1387 = vmatprep.subr.mxu0 0.0
    %1388 = vmatpush1.msra.mxu0 0.0
    %1389 = vmatprep.subr.mxu0 0.0
    %1390 = vmatpush1.msra.mxu0 0.0
    %1391 = vmatprep.subr.mxu0 0.0
    %1392 = vmatpush1.msra.mxu0 0.0
    %1393 = vmatprep.subr.mxu0 0.0
    %1394 = vmatpush1.msra.mxu0 0.0
    %1395 = vmatprep.subr.mxu0 0.0
    %1396 = vmatpush1.msra.mxu0 0.0
    %1397 = vmatprep.subr.mxu0 0.0
    %1398 = vmatpush1.msra.mxu0 0.0
    %1399 = vmatprep.subr.mxu0 0.0
    %1400 = vmatpush1.msra.mxu0 0.0
    %1401 = vmatprep.subr.mxu0 0.0
    %1402 = vmatpush1.msra.mxu0 0.0
    %1403 = vmatprep.subr.mxu0 0.0
    %1404 = vmatpush1.msra.mxu0 0.0
    %1405 = vmatprep.subr.mxu0 0.0
    %1406 = vmatpush1.msra.mxu0 0.0
    %1407 = vmatprep.subr.mxu0 0.0
    %1408 = vmatpush1.msra.mxu0 0.0
    %1409 = vmatprep.subr.mxu0 0.0
    %1410 = vmatpush1.msra.mxu0 0.0
    %1411 = vmatprep.subr.mxu0 0.0
    %1412 = vmatpush1.msra.mxu0 0.0
    %1413 = vmatprep.subr.mxu0 0.0
    %1414 = vmatpush1.msra.mxu0 0.0
    %1415 = vmatprep.subr.mxu0 0.0
    %1416 = vmatpush1.msra.mxu0 0.0
    %1417 = vmatprep.subr.mxu0 0.0
    %1418 = vmatpush1.msra.mxu0 0.0
    %1419 = vmatprep.subr.mxu0 0.0
    %1420 = vmatpush1.msra.mxu0 0.0
    %1421 = vmatprep.subr.mxu0 0.0
    %1422 = vmatpush1.msra.mxu0 0.0
    %1423 = vmatprep.subr.mxu0 0.0
    %1424 = vmatpush1.msra.mxu0 0.0
    %1425 = vmatprep.subr.mxu0 0.0
    %1426 = vmatpush1.msra.mxu0 0.0
    %1427 = vmatprep.mubr.f32.mxu0 0.0
    %v1428 = vand.u32 %v1199, 4294901760
    %v1429 = vsub.f32 %v1199, %v1428
    %1430 = vmatmul.mubr.f32.gmra.mrb[0].mxu0 %v1429
    %v1431 = vpop.f32.mrb[0].mxu0
    %v1432 = vadd.f32 %v1356, %v1431
    %v1433 = vpop.f32.mrb[0].mxu0
    %1434 = vdwg.mxu0
    %1435 = vmatprep.subr.mxu0 0.0
    %v1436 = vand.u32 %v178, 4294901760
    %1437 = vmatpush1.msra.mxu0 %v1436
    %1438 = vmatprep.subr.mxu0 0.0
    %v1439 = vand.u32 %v228, 4294901760
    %1440 = vmatpush1.msra.mxu0 %v1439
    %1441 = vmatprep.subr.mxu0 0.0
    %1442 = vmatpush1.msra.mxu0 0.0
    %1443 = vmatprep.subr.mxu0 0.0
    %1444 = vmatpush1.msra.mxu0 0.0
    %1445 = vmatprep.subr.mxu0 0.0
    %1446 = vmatpush1.msra.mxu0 0.0
    %1447 = vmatprep.subr.mxu0 0.0
    %1448 = vmatpush1.msra.mxu0 0.0
    %1449 = vmatprep.subr.mxu0 0.0
    %1450 = vmatpush1.msra.mxu0 0.0
    %1451 = vmatprep.subr.mxu0 0.0
    %1452 = vmatpush1.msra.mxu0 0.0
    %1453 = vmatprep.subr.mxu0 0.0
    %1454 = vmatpush1.msra.mxu0 0.0
    %1455 = vmatprep.subr.mxu0 0.0
    %1456 = vmatpush1.msra.mxu0 0.0
    %1457 = vmatprep.subr.mxu0 0.0
    %1458 = vmatpush1.msra.mxu0 0.0
    %1459 = vmatprep.subr.mxu0 0.0
    %1460 = vmatpush1.msra.mxu0 0.0
    %1461 = vmatprep.subr.mxu0 0.0
    %1462 = vmatpush1.msra.mxu0 0.0
    %1463 = vmatprep.subr.mxu0 0.0
    %1464 = vmatpush1.msra.mxu0 0.0
    %1465 = vmatprep.subr.mxu0 0.0
    %1466 = vmatpush1.msra.mxu0 0.0
    %1467 = vmatprep.subr.mxu0 0.0
    %1468 = vmatpush1.msra.mxu0 0.0
    %1469 = vmatprep.subr.mxu0 0.0
    %1470 = vmatpush1.msra.mxu0 0.0
    %1471 = vmatprep.subr.mxu0 0.0
    %1472 = vmatpush1.msra.mxu0 0.0
    %1473 = vmatprep.subr.mxu0 0.0
    %1474 = vmatpush1.msra.mxu0 0.0
    %1475 = vmatprep.subr.mxu0 0.0
    %1476 = vmatpush1.msra.mxu0 0.0
    %1477 = vmatprep.subr.mxu0 0.0
    %1478 = vmatpush1.msra.mxu0 0.0
    %1479 = vmatprep.subr.mxu0 0.0
    %1480 = vmatpush1.msra.mxu0 0.0
    %1481 = vmatprep.subr.mxu0 0.0
    %1482 = vmatpush1.msra.mxu0 0.0
    %1483 = vmatprep.subr.mxu0 0.0
    %1484 = vmatpush1.msra.mxu0 0.0
    %1485 = vmatprep.subr.mxu0 0.0
    %1486 = vmatpush1.msra.mxu0 0.0
    %1487 = vmatprep.subr.mxu0 0.0
    %1488 = vmatpush1.msra.mxu0 0.0
    %1489 = vmatprep.subr.mxu0 0.0
    %1490 = vmatpush1.msra.mxu0 0.0
    %1491 = vmatprep.subr.mxu0 0.0
    %1492 = vmatpush1.msra.mxu0 0.0
    %1493 = vmatprep.subr.mxu0 0.0
    %1494 = vmatpush1.msra.mxu0 0.0
    %1495 = vmatprep.subr.mxu0 0.0
    %1496 = vmatpush1.msra.mxu0 0.0
    %1497 = vmatprep.subr.mxu0 0.0
    %1498 = vmatpush1.msra.mxu0 0.0
    %1499 = vmatprep.subr.mxu0 0.0
    %1500 = vmatpush1.msra.mxu0 0.0
    %1501 = vmatprep.mubr.f32.mxu0 0.0
    %v1502 = vand.u32 %v1199, 4294901760
    %v1503 = vsub.f32 %v1199, %v1502
    %v1504 = vand.u32 %v1503, 4294901760
    %1505 = vmatmul.mubr.f32.gmra.mrb[0].mxu0 %v1504
    %v1506 = vpop.f32.mrb[0].mxu0
    %v1507 = vadd.f32 %v1432, %v1506
    %v1508 = vpop.f32.mrb[0].mxu0
    %1509 = vdwg.mxu0
    %1510 = vmatprep.subr.mxu0 0.0
    %v1511 = vand.u32 %v178, 4294901760
    %v1512 = vsub.f32 %v178, %v1511
    %v1513 = vand.u32 %v1512, 4294901760
    %1514 = vmatpush1.msra.mxu0 %v1513
    %1515 = vmatprep.subr.mxu0 0.0
    %v1516 = vand.u32 %v228, 4294901760
    %v1517 = vsub.f32 %v228, %v1516
    %v1518 = vand.u32 %v1517, 4294901760
    %1519 = vmatpush1.msra.mxu0 %v1518
    %1520 = vmatprep.subr.mxu0 0.0
    %1521 = vmatpush1.msra.mxu0 0.0
    %1522 = vmatprep.subr.mxu0 0.0
    %1523 = vmatpush1.msra.mxu0 0.0
    %1524 = vmatprep.subr.mxu0 0.0
    %1525 = vmatpush1.msra.mxu0 0.0
    %1526 = vmatprep.subr.mxu0 0.0
    %1527 = vmatpush1.msra.mxu0 0.0
    %1528 = vmatprep.subr.mxu0 0.0
    %1529 = vmatpush1.msra.mxu0 0.0
    %1530 = vmatprep.subr.mxu0 0.0
    %1531 = vmatpush1.msra.mxu0 0.0
    %1532 = vmatprep.subr.mxu0 0.0
    %1533 = vmatpush1.msra.mxu0 0.0
    %1534 = vmatprep.subr.mxu0 0.0
    %1535 = vmatpush1.msra.mxu0 0.0
    %1536 = vmatprep.subr.mxu0 0.0
    %1537 = vmatpush1.msra.mxu0 0.0
    %1538 = vmatprep.subr.mxu0 0.0
    %1539 = vmatpush1.msra.mxu0 0.0
    %1540 = vmatprep.subr.mxu0 0.0
    %1541 = vmatpush1.msra.mxu0 0.0
    %1542 = vmatprep.subr.mxu0 0.0
    %1543 = vmatpush1.msra.mxu0 0.0
    %1544 = vmatprep.subr.mxu0 0.0
    %1545 = vmatpush1.msra.mxu0 0.0
    %1546 = vmatprep.subr.mxu0 0.0
    %1547 = vmatpush1.msra.mxu0 0.0
    %1548 = vmatprep.subr.mxu0 0.0
    %1549 = vmatpush1.msra.mxu0 0.0
    %1550 = vmatprep.subr.mxu0 0.0
    %1551 = vmatpush1.msra.mxu0 0.0
    %1552 = vmatprep.subr.mxu0 0.0
    %1553 = vmatpush1.msra.mxu0 0.0
    %1554 = vmatprep.subr.mxu0 0.0
    %1555 = vmatpush1.msra.mxu0 0.0
    %1556 = vmatprep.subr.mxu0 0.0
    %1557 = vmatpush1.msra.mxu0 0.0
    %1558 = vmatprep.subr.mxu0 0.0
    %1559 = vmatpush1.msra.mxu0 0.0
    %1560 = vmatprep.subr.mxu0 0.0
    %1561 = vmatpush1.msra.mxu0 0.0
    %1562 = vmatprep.subr.mxu0 0.0
    %1563 = vmatpush1.msra.mxu0 0.0
    %1564 = vmatprep.subr.mxu0 0.0
    %1565 = vmatpush1.msra.mxu0 0.0
    %1566 = vmatprep.subr.mxu0 0.0
    %1567 = vmatpush1.msra.mxu0 0.0
    %1568 = vmatprep.subr.mxu0 0.0
    %1569 = vmatpush1.msra.mxu0 0.0
    %1570 = vmatprep.subr.mxu0 0.0
    %1571 = vmatpush1.msra.mxu0 0.0
    %1572 = vmatprep.subr.mxu0 0.0
    %1573 = vmatpush1.msra.mxu0 0.0
    %1574 = vmatprep.subr.mxu0 0.0
    %1575 = vmatpush1.msra.mxu0 0.0
    %1576 = vmatprep.subr.mxu0 0.0
    %1577 = vmatpush1.msra.mxu0 0.0
    %1578 = vmatprep.subr.mxu0 0.0
    %1579 = vmatpush1.msra.mxu0 0.0
    %1580 = vmatprep.mubr.f32.mxu0 0.0
    %v1581 = vand.u32 %v1199, 4294901760
    %1582 = vmatmul.mubr.f32.gmra.mrb[0].mxu0 %v1581
    %v1583 = vpop.f32.mrb[0].mxu0
    %v1584 = vadd.f32 %v1507, %v1583
    %v1585 = vpop.f32.mrb[0].mxu0
    %1586 = vdwg.mxu0
    %1587 = vmatprep.subr.mxu0 0.0
    %v1588 = vand.u32 %v178, 4294901760
    %1589 = vmatpush1.msra.mxu0 %v1588
    %1590 = vmatprep.subr.mxu0 0.0
    %v1591 = vand.u32 %v228, 4294901760
    %1592 = vmatpush1.msra.mxu0 %v1591
    %1593 = vmatprep.subr.mxu0 0.0
    %1594 = vmatpush1.msra.mxu0 0.0
    %1595 = vmatprep.subr.mxu0 0.0
    %1596 = vmatpush1.msra.mxu0 0.0
    %1597 = vmatprep.subr.mxu0 0.0
    %1598 = vmatpush1.msra.mxu0 0.0
    %1599 = vmatprep.subr.mxu0 0.0
    %1600 = vmatpush1.msra.mxu0 0.0
    %1601 = vmatprep.subr.mxu0 0.0
    %1602 = vmatpush1.msra.mxu0 0.0
    %1603 = vmatprep.subr.mxu0 0.0
    %1604 = vmatpush1.msra.mxu0 0.0
    %1605 = vmatprep.subr.mxu0 0.0
    %1606 = vmatpush1.msra.mxu0 0.0
    %1607 = vmatprep.subr.mxu0 0.0
    %1608 = vmatpush1.msra.mxu0 0.0
    %1609 = vmatprep.subr.mxu0 0.0
    %1610 = vmatpush1.msra.mxu0 0.0
    %1611 = vmatprep.subr.mxu0 0.0
    %1612 = vmatpush1.msra.mxu0 0.0
    %1613 = vmatprep.subr.mxu0 0.0
    %1614 = vmatpush1.msra.mxu0 0.0
    %1615 = vmatprep.subr.mxu0 0.0
    %1616 = vmatpush1.msra.mxu0 0.0
    %1617 = vmatprep.subr.mxu0 0.0
    %1618 = vmatpush1.msra.mxu0 0.0
    %1619 = vmatprep.subr.mxu0 0.0
    %1620 = vmatpush1.msra.mxu0 0.0
    %1621 = vmatprep.subr.mxu0 0.0
    %1622 = vmatpush1.msra.mxu0 0.0
    %1623 = vmatprep.subr.mxu0 0.0
    %1624 = vmatpush1.msra.mxu0 0.0
    %1625 = vmatprep.subr.mxu0 0.0
    %1626 = vmatpush1.msra.mxu0 0.0
    %1627 = vmatprep.subr.mxu0 0.0
    %1628 = vmatpush1.msra.mxu0 0.0
    %1629 = vmatprep.subr.mxu0 0.0
    %1630 = vmatpush1.msra.mxu0 0.0
    %1631 = vmatprep.subr.mxu0 0.0
    %1632 = vmatpush1.msra.mxu0 0.0
    %1633 = vmatprep.subr.mxu0 0.0
    %1634 = vmatpush1.msra.mxu0 0.0
    %1635 = vmatprep.subr.mxu0 0.0
    %1636 = vmatpush1.msra.mxu0 0.0
    %1637 = vmatprep.subr.mxu0 0.0
    %1638 = vmatpush1.msra.mxu0 0.0
    %1639 = vmatprep.subr.mxu0 0.0
    %1640 = vmatpush1.msra.mxu0 0.0
    %1641 = vmatprep.subr.mxu0 0.0
    %1642 = vmatpush1.msra.mxu0 0.0
    %1643 = vmatprep.subr.mxu0 0.0
    %1644 = vmatpush1.msra.mxu0 0.0
    %1645 = vmatprep.subr.mxu0 0.0
    %1646 = vmatpush1.msra.mxu0 0.0
    %1647 = vmatprep.subr.mxu0 0.0
    %1648 = vmatpush1.msra.mxu0 0.0
    %1649 = vmatprep.subr.mxu0 0.0
    %1650 = vmatpush1.msra.mxu0 0.0
    %1651 = vmatprep.subr.mxu0 0.0
    %1652 = vmatpush1.msra.mxu0 0.0
    %1653 = vmatprep.mubr.f32.mxu0 0.0
    %v1654 = vand.u32 %v1199, 4294901760
    %1655 = vmatmul.mubr.f32.gmra.mrb[0].mxu0 %v1654
    %v1656 = vpop.f32.mrb[0].mxu0
    %v1657 = vadd.f32 %v1584, %v1656
    %v1658 = vpop.f32.mrb[0].mxu0
    %1659 = vdwg.mxu0
    %v1661 = vsel %vm1175, %v1197, 0
    %1663 = vmatprep.subr.mxu0 0.0
    %v1664 = vand.u32 %v179, 4294901760
    %1665 = vmatpush1.msra.mxu0 %v1664
    %1666 = vmatprep.subr.mxu0 0.0
    %v1667 = vand.u32 %v229, 4294901760
    %1668 = vmatpush1.msra.mxu0 %v1667
    %1669 = vmatprep.subr.mxu0 0.0
    %1670 = vmatpush1.msra.mxu0 0.0
    %1671 = vmatprep.subr.mxu0 0.0
    %1672 = vmatpush1.msra.mxu0 0.0
    %1673 = vmatprep.subr.mxu0 0.0
    %1674 = vmatpush1.msra.mxu0 0.0
    %1675 = vmatprep.subr.mxu0 0.0
    %1676 = vmatpush1.msra.mxu0 0.0
    %1677 = vmatprep.subr.mxu0 0.0
    %1678 = vmatpush1.msra.mxu0 0.0
    %1679 = vmatprep.subr.mxu0 0.0
    %1680 = vmatpush1.msra.mxu0 0.0
    %1681 = vmatprep.subr.mxu0 0.0
    %1682 = vmatpush1.msra.mxu0 0.0
    %1683 = vmatprep.subr.mxu0 0.0
    %1684 = vmatpush1.msra.mxu0 0.0
    %1685 = vmatprep.subr.mxu0 0.0
    %1686 = vmatpush1.msra.mxu0 0.0
    %1687 = vmatprep.subr.mxu0 0.0
    %1688 = vmatpush1.msra.mxu0 0.0
    %1689 = vmatprep.subr.mxu0 0.0
    %1690 = vmatpush1.msra.mxu0 0.0
    %1691 = vmatprep.subr.mxu0 0.0
    %1692 = vmatpush1.msra.mxu0 0.0
    %1693 = vmatprep.subr.mxu0 0.0
    %1694 = vmatpush1.msra.mxu0 0.0
    %1695 = vmatprep.subr.mxu0 0.0
    %1696 = vmatpush1.msra.mxu0 0.0
    %1697 = vmatprep.subr.mxu0 0.0
    %1698 = vmatpush1.msra.mxu0 0.0
    %1699 = vmatprep.subr.mxu0 0.0
    %1700 = vmatpush1.msra.mxu0 0.0
    %1701 = vmatprep.subr.mxu0 0.0
    %1702 = vmatpush1.msra.mxu0 0.0
    %1703 = vmatprep.subr.mxu0 0.0
    %1704 = vmatpush1.msra.mxu0 0.0
    %1705 = vmatprep.subr.mxu0 0.0
    %1706 = vmatpush1.msra.mxu0 0.0
    %1707 = vmatprep.subr.mxu0 0.0
    %1708 = vmatpush1.msra.mxu0 0.0
    %1709 = vmatprep.subr.mxu0 0.0
    %1710 = vmatpush1.msra.mxu0 0.0
    %1711 = vmatprep.subr.mxu0 0.0
    %1712 = vmatpush1.msra.mxu0 0.0
    %1713 = vmatprep.subr.mxu0 0.0
    %1714 = vmatpush1.msra.mxu0 0.0
    %1715 = vmatprep.subr.mxu0 0.0
    %1716 = vmatpush1.msra.mxu0 0.0
    %1717 = vmatprep.subr.mxu0 0.0
    %1718 = vmatpush1.msra.mxu0 0.0
    %1719 = vmatprep.subr.mxu0 0.0
    %1720 = vmatpush1.msra.mxu0 0.0
    %1721 = vmatprep.subr.mxu0 0.0
    %1722 = vmatpush1.msra.mxu0 0.0
    %1723 = vmatprep.subr.mxu0 0.0
    %1724 = vmatpush1.msra.mxu0 0.0
    %1725 = vmatprep.subr.mxu0 0.0
    %1726 = vmatpush1.msra.mxu0 0.0
    %1727 = vmatprep.subr.mxu0 0.0
    %1728 = vmatpush1.msra.mxu0 0.0
    %1729 = vmatprep.mubr.f32.mxu0 0.0
    %v1730 = vand.u32 %v1661, 4294901760
    %v1731 = vsub.f32 %v1661, %v1730
    %v1732 = vand.u32 %v1731, 4294901760
    %v1733 = vsub.f32 %v1731, %v1732
    %v1734 = vand.u32 %v1733, 4294901760
    %1735 = vmatmul.mubr.f32.gmra.mrb[0].mxu0 %v1734
    %v1736 = vpop.f32.mrb[0].mxu0
    %v1737 = vadd.f32 0.0, %v1736
    %v1738 = vpop.f32.mrb[0].mxu0
    %1739 = vdwg.mxu0
    %1740 = vmatprep.subr.mxu0 0.0
    %v1741 = vand.u32 %v179, 4294901760
    %v1742 = vsub.f32 %v179, %v1741
    %v1743 = vand.u32 %v1742, 4294901760
    %v1744 = vsub.f32 %v1742, %v1743
    %v1745 = vand.u32 %v1744, 4294901760
    %1746 = vmatpush1.msra.mxu0 %v1745
    %1747 = vmatprep.subr.mxu0 0.0
    %v1748 = vand.u32 %v229, 4294901760
    %v1749 = vsub.f32 %v229, %v1748
    %v1750 = vand.u32 %v1749, 4294901760
    %v1751 = vsub.f32 %v1749, %v1750
    %v1752 = vand.u32 %v1751, 4294901760
    %1753 = vmatpush1.msra.mxu0 %v1752
    %1754 = vmatprep.subr.mxu0 0.0
    %1755 = vmatpush1.msra.mxu0 0.0
    %1756 = vmatprep.subr.mxu0 0.0
    %1757 = vmatpush1.msra.mxu0 0.0
    %1758 = vmatprep.subr.mxu0 0.0
    %1759 = vmatpush1.msra.mxu0 0.0
    %1760 = vmatprep.subr.mxu0 0.0
    %1761 = vmatpush1.msra.mxu0 0.0
    %1762 = vmatprep.subr.mxu0 0.0
    %1763 = vmatpush1.msra.mxu0 0.0
    %1764 = vmatprep.subr.mxu0 0.0
    %1765 = vmatpush1.msra.mxu0 0.0
    %1766 = vmatprep.subr.mxu0 0.0
    %1767 = vmatpush1.msra.mxu0 0.0
    %1768 = vmatprep.subr.mxu0 0.0
    %1769 = vmatpush1.msra.mxu0 0.0
    %1770 = vmatprep.subr.mxu0 0.0
    %1771 = vmatpush1.msra.mxu0 0.0
    %1772 = vmatprep.subr.mxu0 0.0
    %1773 = vmatpush1.msra.mxu0 0.0
    %1774 = vmatprep.subr.mxu0 0.0
    %1775 = vmatpush1.msra.mxu0 0.0
    %1776 = vmatprep.subr.mxu0 0.0
    %1777 = vmatpush1.msra.mxu0 0.0
    %1778 = vmatprep.subr.mxu0 0.0
    %1779 = vmatpush1.msra.mxu0 0.0
    %1780 = vmatprep.subr.mxu0 0.0
    %1781 = vmatpush1.msra.mxu0 0.0
    %1782 = vmatprep.subr.mxu0 0.0
    %1783 = vmatpush1.msra.mxu0 0.0
    %1784 = vmatprep.subr.mxu0 0.0
    %1785 = vmatpush1.msra.mxu0 0.0
    %1786 = vmatprep.subr.mxu0 0.0
    %1787 = vmatpush1.msra.mxu0 0.0
    %1788 = vmatprep.subr.mxu0 0.0
    %1789 = vmatpush1.msra.mxu0 0.0
    %1790 = vmatprep.subr.mxu0 0.0
    %1791 = vmatpush1.msra.mxu0 0.0
    %1792 = vmatprep.subr.mxu0 0.0
    %1793 = vmatpush1.msra.mxu0 0.0
    %1794 = vmatprep.subr.mxu0 0.0
    %1795 = vmatpush1.msra.mxu0 0.0
    %1796 = vmatprep.subr.mxu0 0.0
    %1797 = vmatpush1.msra.mxu0 0.0
    %1798 = vmatprep.subr.mxu0 0.0
    %1799 = vmatpush1.msra.mxu0 0.0
    %1800 = vmatprep.subr.mxu0 0.0
    %1801 = vmatpush1.msra.mxu0 0.0
    %1802 = vmatprep.subr.mxu0 0.0
    %1803 = vmatpush1.msra.mxu0 0.0
    %1804 = vmatprep.subr.mxu0 0.0
    %1805 = vmatpush1.msra.mxu0 0.0
    %1806 = vmatprep.subr.mxu0 0.0
    %1807 = vmatpush1.msra.mxu0 0.0
    %1808 = vmatprep.subr.mxu0 0.0
    %1809 = vmatpush1.msra.mxu0 0.0
    %1810 = vmatprep.subr.mxu0 0.0
    %1811 = vmatpush1.msra.mxu0 0.0
    %1812 = vmatprep.subr.mxu0 0.0
    %1813 = vmatpush1.msra.mxu0 0.0
    %1814 = vmatprep.mubr.f32.mxu0 0.0
    %v1815 = vand.u32 %v1661, 4294901760
    %1816 = vmatmul.mubr.f32.gmra.mrb[0].mxu0 %v1815
    %v1817 = vpop.f32.mrb[0].mxu0
    %v1818 = vadd.f32 %v1737, %v1817
    %v1819 = vpop.f32.mrb[0].mxu0
    %1820 = vdwg.mxu0
    %1821 = vmatprep.subr.mxu0 0.0
    %v1822 = vand.u32 %v179, 4294901760
    %v1823 = vsub.f32 %v179, %v1822
    %1824 = vmatpush1.msra.mxu0 %v1823
    %1825 = vmatprep.subr.mxu0 0.0
    %v1826 = vand.u32 %v229, 4294901760
    %v1827 = vsub.f32 %v229, %v1826
    %1828 = vmatpush1.msra.mxu0 %v1827
    %1829 = vmatprep.subr.mxu0 0.0
    %1830 = vmatpush1.msra.mxu0 0.0
    %1831 = vmatprep.subr.mxu0 0.0
    %1832 = vmatpush1.msra.mxu0 0.0
    %1833 = vmatprep.subr.mxu0 0.0
    %1834 = vmatpush1.msra.mxu0 0.0
    %1835 = vmatprep.subr.mxu0 0.0
    %1836 = vmatpush1.msra.mxu0 0.0
    %1837 = vmatprep.subr.mxu0 0.0
    %1838 = vmatpush1.msra.mxu0 0.0
    %1839 = vmatprep.subr.mxu0 0.0
    %1840 = vmatpush1.msra.mxu0 0.0
    %1841 = vmatprep.subr.mxu0 0.0
    %1842 = vmatpush1.msra.mxu0 0.0
    %1843 = vmatprep.subr.mxu0 0.0
    %1844 = vmatpush1.msra.mxu0 0.0
    %1845 = vmatprep.subr.mxu0 0.0
    %1846 = vmatpush1.msra.mxu0 0.0
    %1847 = vmatprep.subr.mxu0 0.0
    %1848 = vmatpush1.msra.mxu0 0.0
    %1849 = vmatprep.subr.mxu0 0.0
    %1850 = vmatpush1.msra.mxu0 0.0
    %1851 = vmatprep.subr.mxu0 0.0
    %1852 = vmatpush1.msra.mxu0 0.0
    %1853 = vmatprep.subr.mxu0 0.0
    %1854 = vmatpush1.msra.mxu0 0.0
    %1855 = vmatprep.subr.mxu0 0.0
    %1856 = vmatpush1.msra.mxu0 0.0
    %1857 = vmatprep.subr.mxu0 0.0
    %1858 = vmatpush1.msra.mxu0 0.0
    %1859 = vmatprep.subr.mxu0 0.0
    %1860 = vmatpush1.msra.mxu0 0.0
    %1861 = vmatprep.subr.mxu0 0.0
    %1862 = vmatpush1.msra.mxu0 0.0
    %1863 = vmatprep.subr.mxu0 0.0
    %1864 = vmatpush1.msra.mxu0 0.0
    %1865 = vmatprep.subr.mxu0 0.0
    %1866 = vmatpush1.msra.mxu0 0.0
    %1867 = vmatprep.subr.mxu0 0.0
    %1868 = vmatpush1.msra.mxu0 0.0
    %1869 = vmatprep.subr.mxu0 0.0
    %1870 = vmatpush1.msra.mxu0 0.0
    %1871 = vmatprep.subr.mxu0 0.0
    %1872 = vmatpush1.msra.mxu0 0.0
    %1873 = vmatprep.subr.mxu0 0.0
    %1874 = vmatpush1.msra.mxu0 0.0
    %1875 = vmatprep.subr.mxu0 0.0
    %1876 = vmatpush1.msra.mxu0 0.0
    %1877 = vmatprep.subr.mxu0 0.0
    %1878 = vmatpush1.msra.mxu0 0.0
    %1879 = vmatprep.subr.mxu0 0.0
    %1880 = vmatpush1.msra.mxu0 0.0
    %1881 = vmatprep.subr.mxu0 0.0
    %1882 = vmatpush1.msra.mxu0 0.0
    %1883 = vmatprep.subr.mxu0 0.0
    %1884 = vmatpush1.msra.mxu0 0.0
    %1885 = vmatprep.subr.mxu0 0.0
    %1886 = vmatpush1.msra.mxu0 0.0
    %1887 = vmatprep.subr.mxu0 0.0
    %1888 = vmatpush1.msra.mxu0 0.0
    %1889 = vmatprep.mubr.f32.mxu0 0.0
    %v1890 = vand.u32 %v1661, 4294901760
    %v1891 = vsub.f32 %v1661, %v1890
    %1892 = vmatmul.mubr.f32.gmra.mrb[0].mxu0 %v1891
    %v1893 = vpop.f32.mrb[0].mxu0
    %v1894 = vadd.f32 %v1818, %v1893
    %v1895 = vpop.f32.mrb[0].mxu0
    %1896 = vdwg.mxu0
    %1897 = vmatprep.subr.mxu0 0.0
    %v1898 = vand.u32 %v179, 4294901760
    %1899 = vmatpush1.msra.mxu0 %v1898
    %1900 = vmatprep.subr.mxu0 0.0
    %v1901 = vand.u32 %v229, 4294901760
    %1902 = vmatpush1.msra.mxu0 %v1901
    %1903 = vmatprep.subr.mxu0 0.0
    %1904 = vmatpush1.msra.mxu0 0.0
    %1905 = vmatprep.subr.mxu0 0.0
    %1906 = vmatpush1.msra.mxu0 0.0
    %1907 = vmatprep.subr.mxu0 0.0
    %1908 = vmatpush1.msra.mxu0 0.0
    %1909 = vmatprep.subr.mxu0 0.0
    %1910 = vmatpush1.msra.mxu0 0.0
    %1911 = vmatprep.subr.mxu0 0.0
    %1912 = vmatpush1.msra.mxu0 0.0
    %1913 = vmatprep.subr.mxu0 0.0
    %1914 = vmatpush1.msra.mxu0 0.0
    %1915 = vmatprep.subr.mxu0 0.0
    %1916 = vmatpush1.msra.mxu0 0.0
    %1917 = vmatprep.subr.mxu0 0.0
    %1918 = vmatpush1.msra.mxu0 0.0
    %1919 = vmatprep.subr.mxu0 0.0
    %1920 = vmatpush1.msra.mxu0 0.0
    %1921 = vmatprep.subr.mxu0 0.0
    %1922 = vmatpush1.msra.mxu0 0.0
    %1923 = vmatprep.subr.mxu0 0.0
    %1924 = vmatpush1.msra.mxu0 0.0
    %1925 = vmatprep.subr.mxu0 0.0
    %1926 = vmatpush1.msra.mxu0 0.0
    %1927 = vmatprep.subr.mxu0 0.0
    %1928 = vmatpush1.msra.mxu0 0.0
    %1929 = vmatprep.subr.mxu0 0.0
    %1930 = vmatpush1.msra.mxu0 0.0
    %1931 = vmatprep.subr.mxu0 0.0
    %1932 = vmatpush1.msra.mxu0 0.0
    %1933 = vmatprep.subr.mxu0 0.0
    %1934 = vmatpush1.msra.mxu0 0.0
    %1935 = vmatprep.subr.mxu0 0.0
    %1936 = vmatpush1.msra.mxu0 0.0
    %1937 = vmatprep.subr.mxu0 0.0
    %1938 = vmatpush1.msra.mxu0 0.0
    %1939 = vmatprep.subr.mxu0 0.0
    %1940 = vmatpush1.msra.mxu0 0.0
    %1941 = vmatprep.subr.mxu0 0.0
    %1942 = vmatpush1.msra.mxu0 0.0
    %1943 = vmatprep.subr.mxu0 0.0
    %1944 = vmatpush1.msra.mxu0 0.0
    %1945 = vmatprep.subr.mxu0 0.0
    %1946 = vmatpush1.msra.mxu0 0.0
    %1947 = vmatprep.subr.mxu0 0.0
    %1948 = vmatpush1.msra.mxu0 0.0
    %1949 = vmatprep.subr.mxu0 0.0
    %1950 = vmatpush1.msra.mxu0 0.0
    %1951 = vmatprep.subr.mxu0 0.0
    %1952 = vmatpush1.msra.mxu0 0.0
    %1953 = vmatprep.subr.mxu0 0.0
    %1954 = vmatpush1.msra.mxu0 0.0
    %1955 = vmatprep.subr.mxu0 0.0
    %1956 = vmatpush1.msra.mxu0 0.0
    %1957 = vmatprep.subr.mxu0 0.0
    %1958 = vmatpush1.msra.mxu0 0.0
    %1959 = vmatprep.subr.mxu0 0.0
    %1960 = vmatpush1.msra.mxu0 0.0
    %1961 = vmatprep.subr.mxu0 0.0
    %1962 = vmatpush1.msra.mxu0 0.0
    %1963 = vmatprep.mubr.f32.mxu0 0.0
    %v1964 = vand.u32 %v1661, 4294901760
    %v1965 = vsub.f32 %v1661, %v1964
    %v1966 = vand.u32 %v1965, 4294901760
    %1967 = vmatmul.mubr.f32.gmra.mrb[0].mxu0 %v1966
    %v1968 = vpop.f32.mrb[0].mxu0
    %v1969 = vadd.f32 %v1894, %v1968
    %v1970 = vpop.f32.mrb[0].mxu0
    %1971 = vdwg.mxu0
    %1972 = vmatprep.subr.mxu0 0.0
    %v1973 = vand.u32 %v179, 4294901760
    %v1974 = vsub.f32 %v179, %v1973
    %v1975 = vand.u32 %v1974, 4294901760
    %1976 = vmatpush1.msra.mxu0 %v1975
    %1977 = vmatprep.subr.mxu0 0.0
    %v1978 = vand.u32 %v229, 4294901760
    %v1979 = vsub.f32 %v229, %v1978
    %v1980 = vand.u32 %v1979, 4294901760
    %1981 = vmatpush1.msra.mxu0 %v1980
    %1982 = vmatprep.subr.mxu0 0.0
    %1983 = vmatpush1.msra.mxu0 0.0
    %1984 = vmatprep.subr.mxu0 0.0
    %1985 = vmatpush1.msra.mxu0 0.0
    %1986 = vmatprep.subr.mxu0 0.0
    %1987 = vmatpush1.msra.mxu0 0.0
    %1988 = vmatprep.subr.mxu0 0.0
    %1989 = vmatpush1.msra.mxu0 0.0
    %1990 = vmatprep.subr.mxu0 0.0
    %1991 = vmatpush1.msra.mxu0 0.0
    %1992 = vmatprep.subr.mxu0 0.0
    %1993 = vmatpush1.msra.mxu0 0.0
    %1994 = vmatprep.subr.mxu0 0.0
    %1995 = vmatpush1.msra.mxu0 0.0
    %1996 = vmatprep.subr.mxu0 0.0
    %1997 = vmatpush1.msra.mxu0 0.0
    %1998 = vmatprep.subr.mxu0 0.0
    %1999 = vmatpush1.msra.mxu0 0.0
    %2000 = vmatprep.subr.mxu0 0.0
    %2001 = vmatpush1.msra.mxu0 0.0
    %2002 = vmatprep.subr.mxu0 0.0
    %2003 = vmatpush1.msra.mxu0 0.0
    %2004 = vmatprep.subr.mxu0 0.0
    %2005 = vmatpush1.msra.mxu0 0.0
    %2006 = vmatprep.subr.mxu0 0.0
    %2007 = vmatpush1.msra.mxu0 0.0
    %2008 = vmatprep.subr.mxu0 0.0
    %2009 = vmatpush1.msra.mxu0 0.0
    %2010 = vmatprep.subr.mxu0 0.0
    %2011 = vmatpush1.msra.mxu0 0.0
    %2012 = vmatprep.subr.mxu0 0.0
    %2013 = vmatpush1.msra.mxu0 0.0
    %2014 = vmatprep.subr.mxu0 0.0
    %2015 = vmatpush1.msra.mxu0 0.0
    %2016 = vmatprep.subr.mxu0 0.0
    %2017 = vmatpush1.msra.mxu0 0.0
    %2018 = vmatprep.subr.mxu0 0.0
    %2019 = vmatpush1.msra.mxu0 0.0
    %2020 = vmatprep.subr.mxu0 0.0
    %2021 = vmatpush1.msra.mxu0 0.0
    %2022 = vmatprep.subr.mxu0 0.0
    %2023 = vmatpush1.msra.mxu0 0.0
    %2024 = vmatprep.subr.mxu0 0.0
    %2025 = vmatpush1.msra.mxu0 0.0
    %2026 = vmatprep.subr.mxu0 0.0
    %2027 = vmatpush1.msra.mxu0 0.0
    %2028 = vmatprep.subr.mxu0 0.0
    %2029 = vmatpush1.msra.mxu0 0.0
    %2030 = vmatprep.subr.mxu0 0.0
    %2031 = vmatpush1.msra.mxu0 0.0
    %2032 = vmatprep.subr.mxu0 0.0
    %2033 = vmatpush1.msra.mxu0 0.0
    %2034 = vmatprep.subr.mxu0 0.0
    %2035 = vmatpush1.msra.mxu0 0.0
    %2036 = vmatprep.subr.mxu0 0.0
    %2037 = vmatpush1.msra.mxu0 0.0
    %2038 = vmatprep.subr.mxu0 0.0
    %2039 = vmatpush1.msra.mxu0 0.0
    %2040 = vmatprep.subr.mxu0 0.0
    %2041 = vmatpush1.msra.mxu0 0.0
    %2042 = vmatprep.mubr.f32.mxu0 0.0
    %v2043 = vand.u32 %v1661, 4294901760
    %2044 = vmatmul.mubr.f32.gmra.mrb[0].mxu0 %v2043
    %v2045 = vpop.f32.mrb[0].mxu0
    %v2046 = vadd.f32 %v1969, %v2045
    %v2047 = vpop.f32.mrb[0].mxu0
    %2048 = vdwg.mxu0
    %2049 = vmatprep.subr.mxu0 0.0
    %v2050 = vand.u32 %v179, 4294901760
    %2051 = vmatpush1.msra.mxu0 %v2050
    %2052 = vmatprep.subr.mxu0 0.0
    %v2053 = vand.u32 %v229, 4294901760
    %2054 = vmatpush1.msra.mxu0 %v2053
    %2055 = vmatprep.subr.mxu0 0.0
    %2056 = vmatpush1.msra.mxu0 0.0
    %2057 = vmatprep.subr.mxu0 0.0
    %2058 = vmatpush1.msra.mxu0 0.0
    %2059 = vmatprep.subr.mxu0 0.0
    %2060 = vmatpush1.msra.mxu0 0.0
    %2061 = vmatprep.subr.mxu0 0.0
    %2062 = vmatpush1.msra.mxu0 0.0
    %2063 = vmatprep.subr.mxu0 0.0
    %2064 = vmatpush1.msra.mxu0 0.0
    %2065 = vmatprep.subr.mxu0 0.0
    %2066 = vmatpush1.msra.mxu0 0.0
    %2067 = vmatprep.subr.mxu0 0.0
    %2068 = vmatpush1.msra.mxu0 0.0
    %2069 = vmatprep.subr.mxu0 0.0
    %2070 = vmatpush1.msra.mxu0 0.0
    %2071 = vmatprep.subr.mxu0 0.0
    %2072 = vmatpush1.msra.mxu0 0.0
    %2073 = vmatprep.subr.mxu0 0.0
    %2074 = vmatpush1.msra.mxu0 0.0
    %2075 = vmatprep.subr.mxu0 0.0
    %2076 = vmatpush1.msra.mxu0 0.0
    %2077 = vmatprep.subr.mxu0 0.0
    %2078 = vmatpush1.msra.mxu0 0.0
    %2079 = vmatprep.subr.mxu0 0.0
    %2080 = vmatpush1.msra.mxu0 0.0
    %2081 = vmatprep.subr.mxu0 0.0
    %2082 = vmatpush1.msra.mxu0 0.0
    %2083 = vmatprep.subr.mxu0 0.0
    %2084 = vmatpush1.msra.mxu0 0.0
    %2085 = vmatprep.subr.mxu0 0.0
    %2086 = vmatpush1.msra.mxu0 0.0
    %2087 = vmatprep.subr.mxu0 0.0
    %2088 = vmatpush1.msra.mxu0 0.0
    %2089 = vmatprep.subr.mxu0 0.0
    %2090 = vmatpush1.msra.mxu0 0.0
    %2091 = vmatprep.subr.mxu0 0.0
    %2092 = vmatpush1.msra.mxu0 0.0
    %2093 = vmatprep.subr.mxu0 0.0
    %2094 = vmatpush1.msra.mxu0 0.0
    %2095 = vmatprep.subr.mxu0 0.0
    %2096 = vmatpush1.msra.mxu0 0.0
    %2097 = vmatprep.subr.mxu0 0.0
    %2098 = vmatpush1.msra.mxu0 0.0
    %2099 = vmatprep.subr.mxu0 0.0
    %2100 = vmatpush1.msra.mxu0 0.0
    %2101 = vmatprep.subr.mxu0 0.0
    %2102 = vmatpush1.msra.mxu0 0.0
    %2103 = vmatprep.subr.mxu0 0.0
    %2104 = vmatpush1.msra.mxu0 0.0
    %2105 = vmatprep.subr.mxu0 0.0
    %2106 = vmatpush1.msra.mxu0 0.0
    %2107 = vmatprep.subr.mxu0 0.0
    %2108 = vmatpush1.msra.mxu0 0.0
    %2109 = vmatprep.subr.mxu0 0.0
    %2110 = vmatpush1.msra.mxu0 0.0
    %2111 = vmatprep.subr.mxu0 0.0
    %2112 = vmatpush1.msra.mxu0 0.0
    %2113 = vmatprep.subr.mxu0 0.0
    %2114 = vmatpush1.msra.mxu0 0.0
    %2115 = vmatprep.mubr.f32.mxu0 0.0
    %v2116 = vand.u32 %v1661, 4294901760
    %2117 = vmatmul.mubr.f32.gmra.mrb[0].mxu0 %v2116
    %v2118 = vpop.f32.mrb[0].mxu0
    %v2119 = vadd.f32 %v2046, %v2118
    %v2120 = vpop.f32.mrb[0].mxu0
    %2121 = vdwg.mxu0
    %v2122 = vcombine.high %v1657, 0.0
    %v2124 = vunpack.c.l.s4 1983009808
    %v2125 = vunpack.c.0.s8 %v2124
    %v2126 = vlaneseq
    %v2127 = vshrl.u32 %v2126, 7
    %v2128 = vsub.s32 %v2125, %v2127
    %v2129 = vrot.slane %v1657, %v2128
    %v2131 = vunpack.c.l.s4 1983009808
    %v2132 = vunpack.c.0.s8 %v2131
    %v2133 = vlaneseq
    %v2134 = vshrl.u32 %v2133, 7
    %v2135 = vsub.s32 %v2132, %v2134
    %v2136 = vrot.slane %v2122, %v2135
    %v2137 = vcombine.high %v2119, 0.0
    %v2139 = vunpack.c.l.s4 1983009808
    %v2140 = vunpack.c.0.s8 %v2139
    %v2141 = vlaneseq
    %v2142 = vshrl.u32 %v2141, 7
    %v2143 = vsub.s32 %v2140, %v2142
    %v2144 = vrot.slane %v2119, %v2143
    %v2146 = vunpack.c.l.s4 1983009808
    %v2147 = vunpack.c.0.s8 %v2146
    %v2148 = vlaneseq
    %v2149 = vshrl.u32 %v2148, 7
    %v2150 = vsub.s32 %v2147, %v2149
    %v2151 = vrot.slane %v2137, %v2150
    %v2152 = vcombine.low %v2129, %v2144
    %v2153 = vcombine.high %v2129, %v2144
    %v2155 = vunpack.c.l.s4 1934713408
    %v2156 = vunpack.c.0.s8 %v2155
    %v2157 = vlaneseq
    %v2158 = vshrl.u32 %v2157, 7
    %v2159 = vsub.s32 %v2156, %v2158
    %v2160 = vrot.slane %v2152, %v2159
    %v2162 = vunpack.c.l.s4 1934713408
    %v2163 = vunpack.c.0.s8 %v2162
    %v2164 = vlaneseq
    %v2165 = vshrl.u32 %v2164, 7
    %v2166 = vsub.s32 %v2163, %v2165
    %v2167 = vrot.slane %v2153, %v2166
    %v2168 = vcombine.low %v2136, %v2151
    %v2169 = vcombine.high %v2136, %v2151
    %v2171 = vunpack.c.l.s4 1934713408
    %v2172 = vunpack.c.0.s8 %v2171
    %v2173 = vlaneseq
    %v2174 = vshrl.u32 %v2173, 7
    %v2175 = vsub.s32 %v2172, %v2174
    %v2176 = vrot.slane %v2168, %v2175
    %v2178 = vunpack.c.l.s4 1934713408
    %v2179 = vunpack.c.0.s8 %v2178
    %v2180 = vlaneseq
    %v2181 = vshrl.u32 %v2180, 7
    %v2182 = vsub.s32 %v2179, %v2181
    %v2183 = vrot.slane %v2169, %v2182
    %v2184 = vcombine.high %v2160, 0.0
    %v2185 = vcombine.high %v2167, 0.0
    %v2186 = vcombine.high %v2176, 0.0
    %v2187 = vcombine.high %v2183, 0.0
    %vm2188 = vcmask 254976
    %2189 = vst.msk [vmem:[#allocation8] sm:$0x3] %vm2188, %v2160
    %2190 = vst.msk [vmem:[#allocation8 + $0x2] sm:$0x3] %vm2188, %v2184
    %2191 = vst.msk [vmem:[#allocation8 + $0x4] sm:$0x3] %vm2188, %v2167
    %2192 = vst.msk [vmem:[#allocation8 + $0x6] sm:$0x3] %vm2188, %v2185
    %2193 = vst.msk [vmem:[#allocation8 + $0x8] sm:$0x3] %vm2188, %v2176
    %2194 = vst.msk [vmem:[#allocation8 + $0xa] sm:$0x3] %vm2188, %v2186
    %2195 = vst.msk [vmem:[#allocation8 + $0xc] sm:$0x3] %vm2188, %v2183
    %2196 = vst.msk [vmem:[#allocation8 + $0xe] sm:$0x3] %vm2188, %v2187
    // Predicated region
    $region26: #{tpu_custom_call.1} parent=1 // pred_check
      _
    $region27: #{tpu_custom_call.1} parent=1 // pred_check_branch
      %2198 = sbr.rel (0) target = $region29
    $region28: #{tpu_custom_call.1} parent=1 // pred_region
      %s2200 = ssub.s32 256, 256
      %2201 = vsyncadd [#allocation4], %s2200
      %s2202 = sshll.u32 [#allocation8], 4
      %s2203 = int_to_ptr.vmem [resolvable:$true] %s2202
      %2208 = dma.vmem_to_hbm [thread:$0]  %s2203, 256, %s3, [#allocation4], 32, 32, 2
    $region29: #{tpu_custom_call.1} parent=1 // pred_fallthru
      _
    // Predicated region
    $region30: #{tpu_custom_call.1} parent=1 // pred_check
      _
    $region31: #{tpu_custom_call.1} parent=1 // pred_check_branch
      %2210 = sbr.rel (0) target = $region33
    $region32: #{tpu_custom_call.1} parent=1 // pred_region
      %2211 = dma.done [#allocation4], 256
    $region33: #{tpu_custom_call.1} parent=1 // pred_fallthru
      _
    %2212 = vsyncpa [#allocation3], 1
    %2213 = vsyncpa [#allocation6], 1
    %2214 = vsyncpa [#allocation4], 1

</llo_original>
